<compile_context>
chip_gen: v7x
topology: tpu7x:2x2x1
jax: 0.10.0
libtpu: 0.0.40
codegen_flags: <defaults>
</compile_context>

<pallas_src>
import functools
import math

import jax
import jax.numpy as jnp
from jax.experimental import pallas as pl
from jax.experimental.pallas import tpu as pltpu


def _round_up(x, m):
    return ((x + m - 1) // m) * m


# --------------------------- Tiled per-layer kernel ------------------------- #
def _sage_conv_tiled_kernel(a_ref, xk_ref, xr_ref, w_ref, b_ref, o_ref, feat_ref,
                            *, apply_relu, f_in_p):
    """One SAGEConv layer, tiled over (row tiles i, contraction tiles k).

    feat_ref: f32 scratch (tm, 2*f_in_p); columns [0:f_in_p] accumulate A@X,
    columns [f_in_p:] hold the root features, so the projection is one MXU dot
    against the stacked [W_l; W_r] weight.
    """
    k = pl.program_id(1)

    @pl.when(k == 0)
    def _init():
        feat_ref[...] = jnp.zeros_like(feat_ref)

    # Neighbor-mean aggregation partial sum (bf16 MXU, f32 accumulation).
    feat_ref[:, :f_in_p] += jnp.dot(
        a_ref[...], xk_ref[...], preferred_element_type=jnp.float32)

    @pl.when(k == pl.num_programs(1) - 1)
    def _finalize():
        feat_ref[:, f_in_p:] = xr_ref[...].astype(jnp.float32)
        out = jnp.dot(feat_ref[...].astype(jnp.bfloat16), w_ref[...],
                      preferred_element_type=jnp.float32) + b_ref[...]
        if apply_relu:
            out = jnp.maximum(out, 0.0)
        o_ref[...] = out.astype(o_ref.dtype)


def sage_conv_tiled(a, x, w_cat, b, *, apply_relu, tm, tk, out_dtype=jnp.float32):
    """Pipelined SAGEConv layer. a:(Np,Np) bf16, x:(Np,Fin_p) bf16,
    w_cat:(2*Fin_p,Fout_p) bf16 = [W_l; W_r], b:(1,Fout_p) f32."""
    n_p = a.shape[0]
    f_in_p = x.shape[1]
    f_out_p = w_cat.shape[1]
    grid = (n_p // tm, n_p // tk)

    kernel = functools.partial(_sage_conv_tiled_kernel,
                               apply_relu=apply_relu, f_in_p=f_in_p)
    return pl.pallas_call(
        kernel,
        out_shape=jax.ShapeDtypeStruct((n_p, f_out_p), out_dtype),
        grid_spec=pltpu.PrefetchScalarGridSpec(
            num_scalar_prefetch=0,
            grid=grid,
            in_specs=[
                pl.BlockSpec((tm, tk), lambda i, k: (i, k)),        # A tile
                pl.BlockSpec((tk, f_in_p), lambda i, k: (k, 0)),    # X (neighbor rows)
                pl.BlockSpec((tm, f_in_p), lambda i, k: (i, 0)),    # X (root rows)
                pl.BlockSpec((2 * f_in_p, f_out_p), lambda i, k: (0, 0)),
                pl.BlockSpec((1, f_out_p), lambda i, k: (0, 0)),
            ],
            out_specs=pl.BlockSpec((tm, f_out_p), lambda i, k: (i, 0)),
            scratch_shapes=[pltpu.VMEM((tm, 2 * f_in_p), jnp.float32)],
        ),
        compiler_params=pltpu.CompilerParams(
            dimension_semantics=("parallel", "arbitrary"),
            vmem_limit_bytes=48 * 1024 * 1024,
        ),
    )(a, x, x, w_cat, b)


# ----------------------- Fully fused kernel (small graphs) ------------------ #
def _fused_gnn_kernel(a_ref, x_ref, w1_ref, b1_ref, w2_ref, b2_ref, w3_ref, b3_ref,
                      o_ref, h_ref):
    """All three SAGEConv layers in one kernel; hidden activations stay in a
    bf16 VMEM scratch (half the footprint of f32, matmul operands already in
    the MXU dtype)."""
    a = a_ref[...]

    def layer(feat_bf16, w_ref_, b_ref_, relu):
        f_in = feat_bf16.shape[1]
        agg = jnp.dot(a, feat_bf16, preferred_element_type=jnp.float32)
        out = (
            jnp.dot(agg.astype(jnp.bfloat16), w_ref_[:f_in, :],
                    preferred_element_type=jnp.float32)
            + jnp.dot(feat_bf16, w_ref_[f_in:, :],
                      preferred_element_type=jnp.float32)
            + b_ref_[...]
        )
        return jnp.maximum(out, 0.0) if relu else out

    h_ref[...] = layer(x_ref[...], w1_ref, b1_ref, True).astype(h_ref.dtype)
    h_ref[...] = layer(h_ref[...], w2_ref, b2_ref, True).astype(h_ref.dtype)
    o_ref[...] = layer(h_ref[...], w3_ref, b3_ref, False).astype(o_ref.dtype)


def gnn_fused_small(a, x, packed, f_out_p):
    n_p = a.shape[0]
    (w1, b1), (w2, b2), (w3, b3) = packed
    h_p = w1.shape[1]
    vmem = pl.BlockSpec(memory_space=pltpu.MemorySpace.VMEM)
    return pl.pallas_call(
        _fused_gnn_kernel,
        out_shape=jax.ShapeDtypeStruct((n_p, f_out_p), jnp.float32),
        in_specs=[vmem] * 8,
        out_specs=vmem,
        scratch_shapes=[pltpu.VMEM((n_p, h_p), jnp.bfloat16)],
        compiler_params=pltpu.CompilerParams(vmem_limit_bytes=48 * 1024 * 1024),
    )(a, x, w1, b1, w2, b2, w3, b3)


# ------------------------------- Glue (JAX) -------------------------------- #
def build_mean_adjacency(edge_index, num_nodes, num_nodes_padded):
    """Row-normalized dense adjacency A[i,j] = (#edges j->i)/in_deg(i), bf16."""
    src, dst = edge_index[0], edge_index[1]
    adj = jnp.zeros((num_nodes_padded, num_nodes_padded),
                    jnp.float32).at[dst, src].add(1.0)
    deg = adj.sum(axis=1, keepdims=True)
    return (adj / jnp.maximum(deg, 1.0)).astype(jnp.bfloat16)


def _pack_layer(p, f_in_p, f_out_p):
    """Pad W_l/W_r/b to lane-aligned sizes and stack [W_l; W_r] (bf16)."""
    f_in, f_out = p["w_l"].shape
    wl = jnp.zeros((f_in_p, f_out_p), jnp.float32).at[:f_in, :f_out].set(p["w_l"])
    wr = jnp.zeros((f_in_p, f_out_p), jnp.float32).at[:f_in, :f_out].set(p["w_r"])
    w_cat = jnp.concatenate([wl, wr], axis=0).astype(jnp.bfloat16)
    b = jnp.zeros((1, f_out_p), jnp.float32).at[0, :f_out].set(p["b"])
    return w_cat, b


def _fused_fits(n, f_in_p, h_p, f_out_p, budget_bytes=24 * 1024 * 1024):
    n_p = _round_up(n, 128)
    need = (n_p * n_p * 2            # A (bf16)
            + n_p * f_in_p * 2       # X (bf16)
            + n_p * h_p * 2          # hidden scratch (bf16)
            + n_p * f_out_p * 4      # output (f32)
            + 2 * (f_in_p + 2 * h_p) * max(h_p, f_out_p) * 2)  # weights
    return need <= budget_bytes


def init_params(input_dim, hidden_dim, output_dim, key):
    def layer(k, f_in, f_out):
        k1, k2, k3 = jax.random.split(k, 3)
        scale = 1.0 / jnp.sqrt(jnp.float32(f_in))
        return {
            "w_l": jax.random.normal(k1, (f_in, f_out), jnp.float32) * scale,
            "w_r": jax.random.normal(k2, (f_in, f_out), jnp.float32) * scale,
            "b": jax.random.normal(k3, (f_out,), jnp.float32) * 0.01,
        }

    k1, k2, k3 = jax.random.split(key, 3)
    return {
        "conv1": layer(k1, input_dim, hidden_dim),
        "conv2": layer(k2, hidden_dim, hidden_dim),
        "conv3": layer(k3, hidden_dim, output_dim),
    }


def gnn_classifier_forward(params, x, edge_index, *, tm=512, tk=512,
                           force_tiled=False):
    """Forward pass of GNNClassifier (dropout = identity, i.e. eval mode)."""
    # TODO(synk): training-mode Dropout(p=0.3) omitted (inference semantics).
    n, f_in = x.shape
    hidden = params["conv1"]["w_l"].shape[1]
    f_out = params["conv3"]["w_l"].shape[1]

    f_in_p = _round_up(f_in, 128)
    h_p = _round_up(hidden, 128)
    f_out_p = _round_up(f_out, 128)

    packed = [
        _pack_layer(params["conv1"], f_in_p, h_p),
        _pack_layer(params["conv2"], h_p, h_p),
        _pack_layer(params["conv3"], h_p, f_out_p),
    ]

    use_fused = (not force_tiled) and _fused_fits(n, f_in_p, h_p, f_out_p)
    if use_fused:
        n_p = _round_up(n, 128)
    else:
        tm = min(tm, _round_up(n, 128))
        tk = min(tk, _round_up(n, 128))
        n_p = _round_up(n, math.lcm(tm, tk))

    a = build_mean_adjacency(edge_index, n, n_p)                    # (Np, Np) bf16
    x_p = jnp.zeros((n_p, f_in_p), jnp.float32).at[:n, :f_in].set(x)
    x_p = x_p.astype(jnp.bfloat16)

    if use_fused:
        out_p = gnn_fused_small(a, x_p, packed, f_out_p)
    else:
        (w1, b1), (w2, b2), (w3, b3) = packed
        h = sage_conv_tiled(a, x_p, w1, b1, apply_relu=True, tm=tm, tk=tk,
                            out_dtype=jnp.bfloat16)
        h = sage_conv_tiled(a, h, w2, b2, apply_relu=True, tm=tm, tk=tk,
                            out_dtype=jnp.bfloat16)
        out_p = sage_conv_tiled(a, h, w3, b3, apply_relu=False, tm=tm, tk=tk,
                                out_dtype=jnp.float32)

    return out_p[:n, :f_out]


# ----------------------------- Reference checks ----------------------------- #
def _dense_mean_adj_f32(edge_index, n):
    src, dst = edge_index[0], edge_index[1]
    adj = jnp.zeros((n, n), jnp.float32).at[dst, src].add(1.0)
    deg = adj.sum(axis=1, keepdims=True)
    return adj / jnp.maximum(deg, 1.0)


def _reference_forward_f32(params, x, edge_index):
    a = _dense_mean_adj_f32(edge_index, x.shape[0])

    def layer(p, h, relu):
        out = (a @ h) @ p["w_l"] + h @ p["w_r"] + p["b"]
        return jnp.maximum(out, 0.0) if relu else out

    h = layer(params["conv1"], x, True)
    h = layer(params["conv2"], h, True)
    return layer(params["conv3"], h, False)


def _reference_forward_bf16(params, x, edge_index):
    """Mimics the kernel's mixed precision (bf16 operands, f32 accumulation)."""
    a = _dense_mean_adj_f32(edge_index, x.shape[0]).astype(jnp.bfloat16)

    def layer(p, h_bf16, relu):
        agg = jnp.dot(a, h_bf16, preferred_element_type=jnp.float32)
        out = (jnp.dot(agg.astype(jnp.bfloat16), p["w_l"].astype(jnp.bfloat16),
                       preferred_element_type=jnp.float32)
               + jnp.dot(h_bf16, p["w_r"].astype(jnp.bfloat16),
                         preferred_element_type=jnp.float32)
               + p["b"])
        return jnp.maximum(out, 0.0) if relu else out

    h = layer(params["conv1"], x.astype(jnp.bfloat16), True)
    h = layer(params["conv2"], h.astype(jnp.bfloat16), True)
    return layer(params["conv3"], h.astype(jnp.bfloat16), False)


if __name__ == "__main__":
    key = jax.random.PRNGKey(0)
    k_x, k_e, k_p, k_x2, k_e2 = jax.random.split(key, 5)

    input_dim, hidden_dim, output_dim = 8, 32, 4
    params = init_params(input_dim, hidden_dim, output_dim, k_p)

    # ---- small graph: fully fused single-kernel path ----
    n1, e1 = 16, 48
    x1 = jax.random.normal(k_x, (n1, input_dim), jnp.float32)
    ei1 = jax.random.randint(k_e, (2, e1), 0, n1, jnp.int32)
    out1 = jax.block_until_ready(gnn_classifier_forward(params, x1, ei1))
    assert out1.shape == (n1, output_dim)
    assert jnp.allclose(out1, _reference_forward_bf16(params, x1, ei1),
                        atol=1e-2, rtol=1e-2)
    assert jnp.allclose(out1, _reference_forward_f32(params, x1, ei1),
                        atol=1e-1, rtol=1e-1)

    # ---- larger graph: tiled / pipelined per-layer path (multi-step grid) ----
    n2, e2 = 300, 1500
    x2 = jax.random.normal(k_x2, (n2, input_dim), jnp.float32)
    ei2 = jax.random.randint(k_e2, (2, e2), 0, n2, jnp.int32)
    out2 = jax.block_until_ready(
        gnn_classifier_forward(params, x2, ei2, force_tiled=True, tm=128, tk=128))
    assert out2.shape == (n2, output_dim)
    assert jnp.allclose(out2, _reference_forward_bf16(params, x2, ei2),
                        atol=1e-2, rtol=1e-2)
    assert jnp.allclose(out2, _reference_forward_f32(params, x2, ei2),
                        atol=1e-1, rtol=1e-1)

    print("KERNEL_OK")
</pallas_src>

<mosaic_0001>
module attributes {stable_mosaic.version = 11 : i64} {
  func.func @_fused_gnn_kernel(%arg0: memref<128x128xbf16, #tpu.memory_space<vmem>>, %arg1: memref<128x128xbf16, #tpu.memory_space<vmem>>, %arg2: memref<256x128xbf16, #tpu.memory_space<vmem>>, %arg3: memref<1x128xf32, #tpu.memory_space<vmem>>, %arg4: memref<256x128xbf16, #tpu.memory_space<vmem>>, %arg5: memref<1x128xf32, #tpu.memory_space<vmem>>, %arg6: memref<256x128xbf16, #tpu.memory_space<vmem>>, %arg7: memref<1x128xf32, #tpu.memory_space<vmem>>, %arg8: memref<128x128xf32, #tpu.memory_space<vmem>>, %arg9: memref<128x128xbf16, #tpu.memory_space<vmem>>) attributes {dimension_semantics = [], scalar_prefetch = 0 : i64, scratch_operands = 1 : i64, tpu.core_type = #tpu.core_type<tc>} {
    %c0 = arith.constant 0 : index
    %c0_0 = arith.constant 0 : index
    %0 = vector.load %arg0[%c0, %c0_0] : memref<128x128xbf16, #tpu.memory_space<vmem>>, vector<128x128xbf16>
    %c0_1 = arith.constant 0 : index
    %c0_2 = arith.constant 0 : index
    %1 = vector.load %arg1[%c0_1, %c0_2] : memref<128x128xbf16, #tpu.memory_space<vmem>>, vector<128x128xbf16>
    %cst = arith.constant dense<0.000000e+00> : vector<128x128xf32>
    %2 = tpu.matmul %0, %1, %cst {dimension_numbers = #tpu.dot_dimension_numbers<[1], [0], [0], [1], [0, 0, 1, 1], [], []>} : vector<128x128xbf16>, vector<128x128xbf16>, vector<128x128xf32> -> vector<128x128xf32>
    %3 = arith.truncf %2 : vector<128x128xf32> to vector<128x128xbf16>
    %c0_3 = arith.constant 0 : index
    %c0_4 = arith.constant 0 : index
    %4 = vector.load %arg2[%c0_3, %c0_4] : memref<256x128xbf16, #tpu.memory_space<vmem>>, vector<128x128xbf16>
    %cst_5 = arith.constant dense<0.000000e+00> : vector<128x128xf32>
    %5 = tpu.matmul %3, %4, %cst_5 {dimension_numbers = #tpu.dot_dimension_numbers<[1], [0], [0], [1], [0, 0, 1, 1], [], []>} : vector<128x128xbf16>, vector<128x128xbf16>, vector<128x128xf32> -> vector<128x128xf32>
    %c128 = arith.constant 128 : index
    %c0_6 = arith.constant 0 : index
    %6 = vector.load %arg2[%c128, %c0_6] : memref<256x128xbf16, #tpu.memory_space<vmem>>, vector<128x128xbf16>
    %cst_7 = arith.constant dense<0.000000e+00> : vector<128x128xf32>
    %7 = tpu.matmul %1, %6, %cst_7 {dimension_numbers = #tpu.dot_dimension_numbers<[1], [0], [0], [1], [0, 0, 1, 1], [], []>} : vector<128x128xbf16>, vector<128x128xbf16>, vector<128x128xf32> -> vector<128x128xf32>
    %8 = arith.addf %5, %7 : vector<128x128xf32>
    %c0_8 = arith.constant 0 : index
    %c0_9 = arith.constant 0 : index
    %9 = vector.load %arg3[%c0_8, %c0_9] : memref<1x128xf32, #tpu.memory_space<vmem>>, vector<1x128xf32>
    %10 = vector.broadcast %9 : vector<1x128xf32> to vector<128x128xf32>
    %11 = arith.addf %8, %10 : vector<128x128xf32>
    %cst_10 = arith.constant 0.000000e+00 : f32
    %12 = vector.broadcast %cst_10 : f32 to vector<128x128xf32>
    %13 = arith.maximumf %11, %12 : vector<128x128xf32>
    %14 = arith.truncf %13 : vector<128x128xf32> to vector<128x128xbf16>
    %c0_11 = arith.constant 0 : index
    %c0_12 = arith.constant 0 : index
    %15 = vector.load %arg9[%c0_11, %c0_12] : memref<128x128xbf16, #tpu.memory_space<vmem>>, vector<128x128xbf16>
    tpu.vector_store %arg9[%c0_11, %c0_12], %14 {strides = array<i32>} : memref<128x128xbf16, #tpu.memory_space<vmem>>, vector<128x128xbf16>,
    %c0_13 = arith.constant 0 : index
    %c0_14 = arith.constant 0 : index
    %16 = vector.load %arg9[%c0_13, %c0_14] : memref<128x128xbf16, #tpu.memory_space<vmem>>, vector<128x128xbf16>
    %cst_15 = arith.constant dense<0.000000e+00> : vector<128x128xf32>
    %17 = tpu.matmul %0, %16, %cst_15 {dimension_numbers = #tpu.dot_dimension_numbers<[1], [0], [0], [1], [0, 0, 1, 1], [], []>} : vector<128x128xbf16>, vector<128x128xbf16>, vector<128x128xf32> -> vector<128x128xf32>
    %18 = arith.truncf %17 : vector<128x128xf32> to vector<128x128xbf16>
    %c0_16 = arith.constant 0 : index
    %c0_17 = arith.constant 0 : index
    %19 = vector.load %arg4[%c0_16, %c0_17] : memref<256x128xbf16, #tpu.memory_space<vmem>>, vector<128x128xbf16>
    %cst_18 = arith.constant dense<0.000000e+00> : vector<128x128xf32>
    %20 = tpu.matmul %18, %19, %cst_18 {dimension_numbers = #tpu.dot_dimension_numbers<[1], [0], [0], [1], [0, 0, 1, 1], [], []>} : vector<128x128xbf16>, vector<128x128xbf16>, vector<128x128xf32> -> vector<128x128xf32>
    %c128_19 = arith.constant 128 : index
    %c0_20 = arith.constant 0 : index
    %21 = vector.load %arg4[%c128_19, %c0_20] : memref<256x128xbf16, #tpu.memory_space<vmem>>, vector<128x128xbf16>
    %cst_21 = arith.constant dense<0.000000e+00> : vector<128x128xf32>
    %22 = tpu.matmul %16, %21, %cst_21 {dimension_numbers = #tpu.dot_dimension_numbers<[1], [0], [0], [1], [0, 0, 1, 1], [], []>} : vector<128x128xbf16>, vector<128x128xbf16>, vector<128x128xf32> -> vector<128x128xf32>
    %23 = arith.addf %20, %22 : vector<128x128xf32>
    %c0_22 = arith.constant 0 : index
    %c0_23 = arith.constant 0 : index
    %24 = vector.load %arg5[%c0_22, %c0_23] : memref<1x128xf32, #tpu.memory_space<vmem>>, vector<1x128xf32>
    %25 = vector.broadcast %24 : vector<1x128xf32> to vector<128x128xf32>
    %26 = arith.addf %23, %25 : vector<128x128xf32>
    %cst_24 = arith.constant 0.000000e+00 : f32
    %27 = vector.broadcast %cst_24 : f32 to vector<128x128xf32>
    %28 = arith.maximumf %26, %27 : vector<128x128xf32>
    %29 = arith.truncf %28 : vector<128x128xf32> to vector<128x128xbf16>
    %c0_25 = arith.constant 0 : index
    %c0_26 = arith.constant 0 : index
    %30 = vector.load %arg9[%c0_25, %c0_26] : memref<128x128xbf16, #tpu.memory_space<vmem>>, vector<128x128xbf16>
    tpu.vector_store %arg9[%c0_25, %c0_26], %29 {strides = array<i32>} : memref<128x128xbf16, #tpu.memory_space<vmem>>, vector<128x128xbf16>,
    %c0_27 = arith.constant 0 : index
    %c0_28 = arith.constant 0 : index
    %31 = vector.load %arg9[%c0_27, %c0_28] : memref<128x128xbf16, #tpu.memory_space<vmem>>, vector<128x128xbf16>
    %cst_29 = arith.constant dense<0.000000e+00> : vector<128x128xf32>
    %32 = tpu.matmul %0, %31, %cst_29 {dimension_numbers = #tpu.dot_dimension_numbers<[1], [0], [0], [1], [0, 0, 1, 1], [], []>} : vector<128x128xbf16>, vector<128x128xbf16>, vector<128x128xf32> -> vector<128x128xf32>
    %33 = arith.truncf %32 : vector<128x128xf32> to vector<128x128xbf16>
    %c0_30 = arith.constant 0 : index
    %c0_31 = arith.constant 0 : index
    %34 = vector.load %arg6[%c0_30, %c0_31] : memref<256x128xbf16, #tpu.memory_space<vmem>>, vector<128x128xbf16>
    %cst_32 = arith.constant dense<0.000000e+00> : vector<128x128xf32>
    %35 = tpu.matmul %33, %34, %cst_32 {dimension_numbers = #tpu.dot_dimension_numbers<[1], [0], [0], [1], [0, 0, 1, 1], [], []>} : vector<128x128xbf16>, vector<128x128xbf16>, vector<128x128xf32> -> vector<128x128xf32>
    %c128_33 = arith.constant 128 : index
    %c0_34 = arith.constant 0 : index
    %36 = vector.load %arg6[%c128_33, %c0_34] : memref<256x128xbf16, #tpu.memory_space<vmem>>, vector<128x128xbf16>
    %cst_35 = arith.constant dense<0.000000e+00> : vector<128x128xf32>
    %37 = tpu.matmul %31, %36, %cst_35 {dimension_numbers = #tpu.dot_dimension_numbers<[1], [0], [0], [1], [0, 0, 1, 1], [], []>} : vector<128x128xbf16>, vector<128x128xbf16>, vector<128x128xf32> -> vector<128x128xf32>
    %38 = arith.addf %35, %37 : vector<128x128xf32>
    %c0_36 = arith.constant 0 : index
    %c0_37 = arith.constant 0 : index
    %39 = vector.load %arg7[%c0_36, %c0_37] : memref<1x128xf32, #tpu.memory_space<vmem>>, vector<1x128xf32>
    %40 = vector.broadcast %39 : vector<1x128xf32> to vector<128x128xf32>
    %41 = arith.addf %38, %40 : vector<128x128xf32>
    %c0_38 = arith.constant 0 : index
    %c0_39 = arith.constant 0 : index
    %42 = vector.load %arg8[%c0_38, %c0_39] : memref<128x128xf32, #tpu.memory_space<vmem>>, vector<128x128xf32>
    tpu.vector_store %arg8[%c0_38, %c0_39], %41 {strides = array<i32>} : memref<128x128xf32, #tpu.memory_space<vmem>>, vector<128x128xf32>,
    return
  }
}

</mosaic_0001>

<llo_original>
// kernel: tpu_custom_call.1
$region0: #{tpu_custom_call.1}
  #allocation0 [shape = 'u32[]', space=smem, size = 0x4, offset = 0x4, fixed_abs, tag = 'smem constant byte address 0x4 - core index']
  #allocation1 [shape = 'u32[144,128]{1,0:T(1,128)}', space=vmem, size = 0x12000, scoped, tag = 'internal scratch']
  #allocation2 [shape = 'bf16[128,128]{1,0:T(16,128)(2,1)}', space=vmem, size = 0x8000, scoped, tag = 'scratch operand']
  %s0 = inlined_call_operand.hbm [shape: bf16[128,128], index: 0, kind: input, shape index: {}]
  %s1 = inlined_call_operand.hbm [shape: bf16[128,128], index: 1, kind: input, shape index: {}]
  %s2 = inlined_call_operand.hbm [shape: bf16[256,128], index: 2, kind: input, shape index: {}]
  %s3 = inlined_call_operand.vmem [shape: f32[1,128], index: 3, kind: input, shape index: {}]
  %s4 = inlined_call_operand.hbm [shape: bf16[256,128], index: 4, kind: input, shape index: {}]
  %s5 = inlined_call_operand.vmem [shape: f32[1,128], index: 5, kind: input, shape index: {}]
  %s6 = inlined_call_operand.hbm [shape: bf16[256,128], index: 6, kind: input, shape index: {}]
  %s7 = inlined_call_operand.vmem [shape: f32[1,128], index: 7, kind: input, shape index: {}]
  %s8 = inlined_call_operand.hbm [shape: f32[128,128], index: 8, kind: output, shape index: {}]
  %s9 = sld [smem:[#allocation0]]
  $region62: #{tpu_custom_call.1} parent=0
    _
  %s11 = ssub.s32 1, %s9
  %s12 = scalar_select 0, %s11, %s9
  $region1: #{tpu_custom_call.1} parent=0
    #allocation3 [shape = 'u8[32768]{0}', space=vmem, size = 0x8000, scoped, tag = 'input window, operand 0, single buffered']
    #allocation4 [shape = 's32[1]{0}', space=sflag, size = 0x4, scoped, tag = 'scoped memory for tpu_custom_call.1']
    #allocation5 [shape = 's32[1]{0}', space=sflag, size = 0x4, scoped, tag = 'scoped memory for tpu_custom_call.1']
    #allocation6 [shape = 'u8[32768]{0}', space=vmem, size = 0x8000, scoped, tag = 'input window, operand 1, single buffered']
    #allocation7 [shape = 's32[1]{0}', space=sflag, size = 0x4, scoped, tag = 'scoped memory for tpu_custom_call.1']
    #allocation8 [shape = 'u8[65536]{0}', space=vmem, size = 0x10000, scoped, tag = 'input window, operand 2, single buffered']
    #allocation9 [shape = 'u8[65536]{0}', space=vmem, size = 0x10000, scoped, tag = 'input window, operand 4, single buffered']
    #allocation10 [shape = 's32[1]{0}', space=sflag, size = 0x4, scoped, tag = 'scoped memory for tpu_custom_call.1']
    #allocation11 [shape = 'u8[65536]{0}', space=vmem, size = 0x10000, scoped, tag = 'input window, operand 6, single buffered']
    #allocation12 [shape = 'u8[65536]{0}', space=vmem, size = 0x10000, scoped, tag = 'output window, operand 0, single buffered']
    %13 = vsyncpa [#allocation4], 0
    %14 = vsyncpa [#allocation7], 0
    %15 = vsyncpa [#allocation10], 0
    %16 = vsyncpa [#allocation5], 0
    // Predicated region
    $region2: #{tpu_custom_call.1} parent=1 // pred_check
      _
    $region3: #{tpu_custom_call.1} parent=1 // pred_check_branch
      %18 = sbr.rel (0) target = $region5
    $region4: #{tpu_custom_call.1} parent=1 // pred_region
      %s20 = ssub.s32 1024, 1024
      %21 = vsyncadd [#allocation4], %s20
      %s22 = sshll.u32 [#allocation3], 4
      %s23 = int_to_ptr.vmem [resolvable:$true] %s22
      %28 = dma.hbm_to_vmem [thread:$0]  %s0, 1024, %s23, [#allocation4], 64, 64, 4
    $region5: #{tpu_custom_call.1} parent=1 // pred_fallthru
      _
    // Predicated region
    $region6: #{tpu_custom_call.1} parent=1 // pred_check
      _
    $region7: #{tpu_custom_call.1} parent=1 // pred_check_branch
      %30 = sbr.rel (0) target = $region9
    $region8: #{tpu_custom_call.1} parent=1 // pred_region
      %s32 = ssub.s32 1024, 1024
      %33 = vsyncadd [#allocation7], %s32
      %s34 = sshll.u32 [#allocation6], 4
      %s35 = int_to_ptr.vmem [resolvable:$true] %s34
      %40 = dma.hbm_to_vmem [thread:$0]  %s1, 1024, %s35, [#allocation7], 64, 64, 4
    $region9: #{tpu_custom_call.1} parent=1 // pred_fallthru
      _
    // Predicated region
    $region10: #{tpu_custom_call.1} parent=1 // pred_check
      _
    $region11: #{tpu_custom_call.1} parent=1 // pred_check_branch
      %42 = sbr.rel (0) target = $region13
    $region12: #{tpu_custom_call.1} parent=1 // pred_region
      %s44 = ssub.s32 2048, 2048
      %45 = vsyncadd [#allocation7], %s44
      %s46 = sshll.u32 [#allocation8], 4
      %s47 = int_to_ptr.vmem [resolvable:$true] %s46
      %52 = dma.hbm_to_vmem [thread:$0]  %s2, 2048, %s47, [#allocation7], 64, 64, 4
    $region13: #{tpu_custom_call.1} parent=1 // pred_fallthru
      _
    // Predicated region
    $region14: #{tpu_custom_call.1} parent=1 // pred_check
      _
    $region15: #{tpu_custom_call.1} parent=1 // pred_check_branch
      %54 = sbr.rel (0) target = $region17
    $region16: #{tpu_custom_call.1} parent=1 // pred_region
      _
    $region17: #{tpu_custom_call.1} parent=1 // pred_fallthru
      _
    // Predicated region
    $region18: #{tpu_custom_call.1} parent=1 // pred_check
      _
    $region19: #{tpu_custom_call.1} parent=1 // pred_check_branch
      %56 = sbr.rel (0) target = $region21
    $region20: #{tpu_custom_call.1} parent=1 // pred_region
      %s58 = ssub.s32 2048, 2048
      %59 = vsyncadd [#allocation10], %s58
      %s60 = sshll.u32 [#allocation9], 4
      %s61 = int_to_ptr.vmem [resolvable:$true] %s60
      %66 = dma.hbm_to_vmem [thread:$0]  %s4, 2048, %s61, [#allocation10], 64, 64, 4
    $region21: #{tpu_custom_call.1} parent=1 // pred_fallthru
      _
    // Predicated region
    $region22: #{tpu_custom_call.1} parent=1 // pred_check
      _
    $region23: #{tpu_custom_call.1} parent=1 // pred_check_branch
      %68 = sbr.rel (0) target = $region25
    $region24: #{tpu_custom_call.1} parent=1 // pred_region
      _
    $region25: #{tpu_custom_call.1} parent=1 // pred_fallthru
      _
    // Predicated region
    $region26: #{tpu_custom_call.1} parent=1 // pred_check
      _
    $region27: #{tpu_custom_call.1} parent=1 // pred_check_branch
      %70 = sbr.rel (0) target = $region29
    $region28: #{tpu_custom_call.1} parent=1 // pred_region
      %s72 = ssub.s32 2048, 2048
      %73 = vsyncadd [#allocation10], %s72
      %s74 = sshll.u32 [#allocation11], 4
      %s75 = int_to_ptr.vmem [resolvable:$true] %s74
      %80 = dma.hbm_to_vmem [thread:$0]  %s6, 2048, %s75, [#allocation10], 64, 64, 4
    $region29: #{tpu_custom_call.1} parent=1 // pred_fallthru
      _
    // Predicated region
    $region30: #{tpu_custom_call.1} parent=1 // pred_check
      _
    $region31: #{tpu_custom_call.1} parent=1 // pred_check_branch
      %82 = sbr.rel (0) target = $region33
    $region32: #{tpu_custom_call.1} parent=1 // pred_region
      _
    $region33: #{tpu_custom_call.1} parent=1 // pred_fallthru
      _
    // Predicated region
    $region34: #{tpu_custom_call.1} parent=1 // pred_check
      _
    $region35: #{tpu_custom_call.1} parent=1 // pred_check_branch
      %84 = sbr.rel (0) target = $region37
    $region36: #{tpu_custom_call.1} parent=1 // pred_region
      %85 = dma.done [#allocation4], 1024
    $region37: #{tpu_custom_call.1} parent=1 // pred_fallthru
      _
    // Predicated region
    $region38: #{tpu_custom_call.1} parent=1 // pred_check
      _
    $region39: #{tpu_custom_call.1} parent=1 // pred_check_branch
      %87 = sbr.rel (0) target = $region41
    $region40: #{tpu_custom_call.1} parent=1 // pred_region
      %88 = dma.done [#allocation7], 1024
    $region41: #{tpu_custom_call.1} parent=1 // pred_fallthru
      _
    // Predicated region
    $region42: #{tpu_custom_call.1} parent=1 // pred_check
      _
    $region43: #{tpu_custom_call.1} parent=1 // pred_check_branch
      %90 = sbr.rel (0) target = $region45
    $region44: #{tpu_custom_call.1} parent=1 // pred_region
      %91 = dma.done [#allocation7], 2048
    $region45: #{tpu_custom_call.1} parent=1 // pred_fallthru
      _
    // Predicated region
    $region46: #{tpu_custom_call.1} parent=1 // pred_check
      _
    $region47: #{tpu_custom_call.1} parent=1 // pred_check_branch
      %93 = sbr.rel (0) target = $region49
    $region48: #{tpu_custom_call.1} parent=1 // pred_region
      %94 = dma.done [#allocation10], 2048
    $region49: #{tpu_custom_call.1} parent=1 // pred_fallthru
      _
    // Predicated region
    $region50: #{tpu_custom_call.1} parent=1 // pred_check
      _
    $region51: #{tpu_custom_call.1} parent=1 // pred_check_branch
      %96 = sbr.rel (0) target = $region53
    $region52: #{tpu_custom_call.1} parent=1 // pred_region
      %97 = dma.done [#allocation10], 2048
    $region53: #{tpu_custom_call.1} parent=1 // pred_fallthru
      _
    %v99 = vld [vmem:[#allocation3] sm:$0xf]
    %v100 = vld [vmem:[#allocation3 + $0x4] sm:$0xf]
    %v101 = vld [vmem:[#allocation3 + $0x8] sm:$0xf]
    %v102 = vld [vmem:[#allocation3 + $0xc] sm:$0xf]
    %v103 = vld [vmem:[#allocation3 + $0x10] sm:$0xf]
    %v104 = vld [vmem:[#allocation3 + $0x14] sm:$0xf]
    %v105 = vld [vmem:[#allocation3 + $0x18] sm:$0xf]
    %v106 = vld [vmem:[#allocation3 + $0x1c] sm:$0xf]
    %v107 = vld [vmem:[#allocation3 + $0x20] sm:$0xf]
    %v108 = vld [vmem:[#allocation3 + $0x24] sm:$0xf]
    %v109 = vld [vmem:[#allocation3 + $0x28] sm:$0xf]
    %v110 = vld [vmem:[#allocation3 + $0x2c] sm:$0xf]
    %v111 = vld [vmem:[#allocation3 + $0x30] sm:$0xf]
    %v112 = vld [vmem:[#allocation3 + $0x34] sm:$0xf]
    %v113 = vld [vmem:[#allocation3 + $0x38] sm:$0xf]
    %v114 = vld [vmem:[#allocation3 + $0x3c] sm:$0xf]
    %v115 = vld [vmem:[#allocation6] sm:$0xf]
    %v116 = vld [vmem:[#allocation6 + $0x4] sm:$0xf]
    %v117 = vld [vmem:[#allocation6 + $0x8] sm:$0xf]
    %v118 = vld [vmem:[#allocation6 + $0xc] sm:$0xf]
    %v119 = vld [vmem:[#allocation6 + $0x10] sm:$0xf]
    %v120 = vld [vmem:[#allocation6 + $0x14] sm:$0xf]
    %v121 = vld [vmem:[#allocation6 + $0x18] sm:$0xf]
    %v122 = vld [vmem:[#allocation6 + $0x1c] sm:$0xf]
    %v123 = vld [vmem:[#allocation6 + $0x20] sm:$0xf]
    %v124 = vld [vmem:[#allocation6 + $0x24] sm:$0xf]
    %v125 = vld [vmem:[#allocation6 + $0x28] sm:$0xf]
    %v126 = vld [vmem:[#allocation6 + $0x2c] sm:$0xf]
    %v127 = vld [vmem:[#allocation6 + $0x30] sm:$0xf]
    %v128 = vld [vmem:[#allocation6 + $0x34] sm:$0xf]
    %v129 = vld [vmem:[#allocation6 + $0x38] sm:$0xf]
    %v130 = vld [vmem:[#allocation6 + $0x3c] sm:$0xf]
    %v147 = vunpack.c.l.b16 %v99
    %v148 = vunpack.c.l.b16 %v100
    %v149 = vunpack.c.l.b16 %v101
    %v150 = vunpack.c.l.b16 %v102
    %v151 = vunpack.c.l.b16 %v103
    %v152 = vunpack.c.l.b16 %v104
    %v153 = vunpack.c.l.b16 %v105
    %v154 = vunpack.c.l.b16 %v106
    %v155 = vunpack.c.l.b16 %v107
    %v156 = vunpack.c.l.b16 %v108
    %v157 = vunpack.c.l.b16 %v109
    %v158 = vunpack.c.l.b16 %v110
    %v159 = vunpack.c.l.b16 %v111
    %v160 = vunpack.c.l.b16 %v112
    %v161 = vunpack.c.l.b16 %v113
    %v162 = vunpack.c.l.b16 %v114
    %v163 = vpack.c.b16 %v148, %v147
    %v164 = vpack.c.b16 %v150, %v149
    %v165 = vpack.c.b16 %v152, %v151
    %v166 = vpack.c.b16 %v154, %v153
    %v167 = vpack.c.b16 %v156, %v155
    %v168 = vpack.c.b16 %v158, %v157
    %v169 = vpack.c.b16 %v160, %v159
    %v170 = vpack.c.b16 %v162, %v161
    %v195 = vunpack.c.l.b16 %v115
    %v196 = vunpack.c.l.b16 %v116
    %v197 = vunpack.c.l.b16 %v117
    %v198 = vunpack.c.l.b16 %v118
    %v199 = vunpack.c.l.b16 %v119
    %v200 = vunpack.c.l.b16 %v120
    %v201 = vunpack.c.l.b16 %v121
    %v202 = vunpack.c.l.b16 %v122
    %v203 = vunpack.c.l.b16 %v123
    %v204 = vunpack.c.l.b16 %v124
    %v205 = vunpack.c.l.b16 %v125
    %v206 = vunpack.c.l.b16 %v126
    %v207 = vunpack.c.l.b16 %v127
    %v208 = vunpack.c.l.b16 %v128
    %v209 = vunpack.c.l.b16 %v129
    %v210 = vunpack.c.l.b16 %v130
    %v211 = vpack.c.b16 %v196, %v195
    %v212 = vpack.c.b16 %v198, %v197
    %v213 = vpack.c.b16 %v200, %v199
    %v214 = vpack.c.b16 %v202, %v201
    %v215 = vpack.c.b16 %v204, %v203
    %v216 = vpack.c.b16 %v206, %v205
    %v217 = vpack.c.b16 %v208, %v207
    %v218 = vpack.c.b16 %v210, %v209
    %227 = vmatprep.subr.bf16.mxu0 0
    %228 = vmatpush1.bf16.msra.mxu0 %v211
    %229 = vmatprep.subr.bf16.mxu0 0
    %230 = vmatpush1.bf16.msra.mxu0 %v212
    %231 = vmatprep.subr.bf16.mxu0 0
    %232 = vmatpush1.bf16.msra.mxu0 %v213
    %233 = vmatprep.subr.bf16.mxu0 0
    %234 = vmatpush1.bf16.msra.mxu0 %v214
    %235 = vmatprep.subr.bf16.mxu0 0
    %236 = vmatpush1.bf16.msra.mxu0 %v215
    %237 = vmatprep.subr.bf16.mxu0 0
    %238 = vmatpush1.bf16.msra.mxu0 %v216
    %239 = vmatprep.subr.bf16.mxu0 0
    %240 = vmatpush1.bf16.msra.mxu0 %v217
    %241 = vmatprep.subr.bf16.mxu0 0
    %242 = vmatpush1.bf16.msra.mxu0 %v218
    %243 = vmatprep.subr.bf16.mxu0 0
    %244 = vmatpush1.bf16.msra.mxu0 0
    %245 = vmatprep.subr.bf16.mxu0 0
    %246 = vmatpush1.bf16.msra.mxu0 0
    %247 = vmatprep.subr.bf16.mxu0 0
    %248 = vmatpush1.bf16.msra.mxu0 0
    %249 = vmatprep.subr.bf16.mxu0 0
    %250 = vmatpush1.bf16.msra.mxu0 0
    %251 = vmatprep.subr.bf16.mxu0 0
    %252 = vmatpush1.bf16.msra.mxu0 0
    %253 = vmatprep.subr.bf16.mxu0 0
    %254 = vmatpush1.bf16.msra.mxu0 0
    %255 = vmatprep.subr.bf16.mxu0 0
    %256 = vmatpush1.bf16.msra.mxu0 0
    %257 = vmatprep.subr.bf16.mxu0 0
    %258 = vmatpush1.bf16.msra.mxu0 0
    %259 = vmatprep.mubr.bf16.mxu0 0
    %260 = vmatmul.mubr.bf16.gmra.mrb[0].mxu0 %v163
    %v261 = vpop.f32.mrb[0].mxu0
    %v262 = vadd.f32 0.0, %v261
    %v263 = vpop.f32.mrb[0].mxu0
    %v264 = vpop.f32.mrb[0].mxu0
    %v265 = vadd.f32 0.0, %v264
    %v266 = vpop.f32.mrb[0].mxu0
    %267 = vmatprep.mubr.bf16.mxu0 0
    %268 = vmatmul.mubr.bf16.gmra.mrb[0].mxu0 %v164
    %v269 = vpop.f32.mrb[0].mxu0
    %v270 = vadd.f32 0.0, %v269
    %v271 = vpop.f32.mrb[0].mxu0
    %v272 = vpop.f32.mrb[0].mxu0
    %v273 = vadd.f32 0.0, %v272
    %v274 = vpop.f32.mrb[0].mxu0
    %275 = vmatprep.mubr.bf16.mxu0 0
    %276 = vmatmul.mubr.bf16.gmra.mrb[0].mxu0 %v165
    %v277 = vpop.f32.mrb[0].mxu0
    %v278 = vadd.f32 0.0, %v277
    %v279 = vpop.f32.mrb[0].mxu0
    %v280 = vpop.f32.mrb[0].mxu0
    %v281 = vadd.f32 0.0, %v280
    %v282 = vpop.f32.mrb[0].mxu0
    %283 = vmatprep.mubr.bf16.mxu0 0
    %284 = vmatmul.mubr.bf16.gmra.mrb[0].mxu0 %v166
    %v285 = vpop.f32.mrb[0].mxu0
    %v286 = vadd.f32 0.0, %v285
    %v287 = vpop.f32.mrb[0].mxu0
    %v288 = vpop.f32.mrb[0].mxu0
    %v289 = vadd.f32 0.0, %v288
    %v290 = vpop.f32.mrb[0].mxu0
    %291 = vmatprep.mubr.bf16.mxu0 0
    %292 = vmatmul.mubr.bf16.gmra.mrb[0].mxu0 %v167
    %v293 = vpop.f32.mrb[0].mxu0
    %v294 = vadd.f32 0.0, %v293
    %v295 = vpop.f32.mrb[0].mxu0
    %v296 = vpop.f32.mrb[0].mxu0
    %v297 = vadd.f32 0.0, %v296
    %v298 = vpop.f32.mrb[0].mxu0
    %299 = vmatprep.mubr.bf16.mxu0 0
    %300 = vmatmul.mubr.bf16.gmra.mrb[0].mxu0 %v168
    %v301 = vpop.f32.mrb[0].mxu0
    %v302 = vadd.f32 0.0, %v301
    %v303 = vpop.f32.mrb[0].mxu0
    %v304 = vpop.f32.mrb[0].mxu0
    %v305 = vadd.f32 0.0, %v304
    %v306 = vpop.f32.mrb[0].mxu0
    %307 = vmatprep.mubr.bf16.mxu0 0
    %308 = vmatmul.mubr.bf16.gmra.mrb[0].mxu0 %v169
    %v309 = vpop.f32.mrb[0].mxu0
    %v310 = vadd.f32 0.0, %v309
    %v311 = vpop.f32.mrb[0].mxu0
    %v312 = vpop.f32.mrb[0].mxu0
    %v313 = vadd.f32 0.0, %v312
    %v314 = vpop.f32.mrb[0].mxu0
    %315 = vmatprep.mubr.bf16.mxu0 0
    %316 = vmatmul.mubr.bf16.gmra.mrb[0].mxu0 %v170
    %v317 = vpop.f32.mrb[0].mxu0
    %v318 = vadd.f32 0.0, %v317
    %v319 = vpop.f32.mrb[0].mxu0
    %v320 = vpop.f32.mrb[0].mxu0
    %v321 = vadd.f32 0.0, %v320
    %v322 = vpop.f32.mrb[0].mxu0
    %323 = vdwg.mxu0
    %v324 = vpack.c.bf16 %v265, %v262
    %v325 = vpack.c.bf16 %v273, %v270
    %v326 = vpack.c.bf16 %v281, %v278
    %v327 = vpack.c.bf16 %v289, %v286
    %v328 = vpack.c.bf16 %v297, %v294
    %v329 = vpack.c.bf16 %v305, %v302
    %v330 = vpack.c.bf16 %v313, %v310
    %v331 = vpack.c.bf16 %v321, %v318
    %v332 = vld [vmem:[#allocation8] sm:$0xf]
    %v333 = vld [vmem:[#allocation8 + $0x4] sm:$0xf]
    %v334 = vld [vmem:[#allocation8 + $0x8] sm:$0xf]
    %v335 = vld [vmem:[#allocation8 + $0xc] sm:$0xf]
    %v336 = vld [vmem:[#allocation8 + $0x10] sm:$0xf]
    %v337 = vld [vmem:[#allocation8 + $0x14] sm:$0xf]
    %v338 = vld [vmem:[#allocation8 + $0x18] sm:$0xf]
    %v339 = vld [vmem:[#allocation8 + $0x1c] sm:$0xf]
    %v340 = vld [vmem:[#allocation8 + $0x20] sm:$0xf]
    %v341 = vld [vmem:[#allocation8 + $0x24] sm:$0xf]
    %v342 = vld [vmem:[#allocation8 + $0x28] sm:$0xf]
    %v343 = vld [vmem:[#allocation8 + $0x2c] sm:$0xf]
    %v344 = vld [vmem:[#allocation8 + $0x30] sm:$0xf]
    %v345 = vld [vmem:[#allocation8 + $0x34] sm:$0xf]
    %v346 = vld [vmem:[#allocation8 + $0x38] sm:$0xf]
    %v347 = vld [vmem:[#allocation8 + $0x3c] sm:$0xf]
    %v348 = vld [vmem:[#allocation8 + $0x40] sm:$0xf]
    %v349 = vld [vmem:[#allocation8 + $0x44] sm:$0xf]
    %v350 = vld [vmem:[#allocation8 + $0x48] sm:$0xf]
    %v351 = vld [vmem:[#allocation8 + $0x4c] sm:$0xf]
    %v352 = vld [vmem:[#allocation8 + $0x50] sm:$0xf]
    %v353 = vld [vmem:[#allocation8 + $0x54] sm:$0xf]
    %v354 = vld [vmem:[#allocation8 + $0x58] sm:$0xf]
    %v355 = vld [vmem:[#allocation8 + $0x5c] sm:$0xf]
    %v356 = vld [vmem:[#allocation8 + $0x60] sm:$0xf]
    %v357 = vld [vmem:[#allocation8 + $0x64] sm:$0xf]
    %v358 = vld [vmem:[#allocation8 + $0x68] sm:$0xf]
    %v359 = vld [vmem:[#allocation8 + $0x6c] sm:$0xf]
    %v360 = vld [vmem:[#allocation8 + $0x70] sm:$0xf]
    %v361 = vld [vmem:[#allocation8 + $0x74] sm:$0xf]
    %v362 = vld [vmem:[#allocation8 + $0x78] sm:$0xf]
    %v363 = vld [vmem:[#allocation8 + $0x7c] sm:$0xf]
    %v380 = vunpack.c.l.b16 %v348
    %v381 = vunpack.c.l.b16 %v349
    %v382 = vunpack.c.l.b16 %v350
    %v383 = vunpack.c.l.b16 %v351
    %v384 = vunpack.c.l.b16 %v352
    %v385 = vunpack.c.l.b16 %v353
    %v386 = vunpack.c.l.b16 %v354
    %v387 = vunpack.c.l.b16 %v355
    %v388 = vunpack.c.l.b16 %v356
    %v389 = vunpack.c.l.b16 %v357
    %v390 = vunpack.c.l.b16 %v358
    %v391 = vunpack.c.l.b16 %v359
    %v392 = vunpack.c.l.b16 %v360
    %v393 = vunpack.c.l.b16 %v361
    %v394 = vunpack.c.l.b16 %v362
    %v395 = vunpack.c.l.b16 %v363
    %v396 = vpack.c.b16 %v381, %v380
    %v397 = vpack.c.b16 %v383, %v382
    %v398 = vpack.c.b16 %v385, %v384
    %v399 = vpack.c.b16 %v387, %v386
    %v400 = vpack.c.b16 %v389, %v388
    %v401 = vpack.c.b16 %v391, %v390
    %v402 = vpack.c.b16 %v393, %v392
    %v403 = vpack.c.b16 %v395, %v394
    %412 = vmatprep.subr.bf16.mxu0 0
    %413 = vmatpush1.bf16.msra.mxu0 %v396
    %414 = vmatprep.subr.bf16.mxu0 0
    %415 = vmatpush1.bf16.msra.mxu0 %v397
    %416 = vmatprep.subr.bf16.mxu0 0
    %417 = vmatpush1.bf16.msra.mxu0 %v398
    %418 = vmatprep.subr.bf16.mxu0 0
    %419 = vmatpush1.bf16.msra.mxu0 %v399
    %420 = vmatprep.subr.bf16.mxu0 0
    %421 = vmatpush1.bf16.msra.mxu0 %v400
    %422 = vmatprep.subr.bf16.mxu0 0
    %423 = vmatpush1.bf16.msra.mxu0 %v401
    %424 = vmatprep.subr.bf16.mxu0 0
    %425 = vmatpush1.bf16.msra.mxu0 %v402
    %426 = vmatprep.subr.bf16.mxu0 0
    %427 = vmatpush1.bf16.msra.mxu0 %v403
    %428 = vmatprep.subr.bf16.mxu0 0
    %429 = vmatpush1.bf16.msra.mxu0 0
    %430 = vmatprep.subr.bf16.mxu0 0
    %431 = vmatpush1.bf16.msra.mxu0 0
    %432 = vmatprep.subr.bf16.mxu0 0
    %433 = vmatpush1.bf16.msra.mxu0 0
    %434 = vmatprep.subr.bf16.mxu0 0
    %435 = vmatpush1.bf16.msra.mxu0 0
    %436 = vmatprep.subr.bf16.mxu0 0
    %437 = vmatpush1.bf16.msra.mxu0 0
    %438 = vmatprep.subr.bf16.mxu0 0
    %439 = vmatpush1.bf16.msra.mxu0 0
    %440 = vmatprep.subr.bf16.mxu0 0
    %441 = vmatpush1.bf16.msra.mxu0 0
    %442 = vmatprep.subr.bf16.mxu0 0
    %443 = vmatpush1.bf16.msra.mxu0 0
    %444 = vmatprep.mubr.bf16.mxu0 0
    %445 = vmatmul.mubr.bf16.gmra.mrb[0].mxu0 %v211
    %v446 = vpop.f32.mrb[0].mxu0
    %v447 = vadd.f32 0.0, %v446
    %v448 = vpop.f32.mrb[0].mxu0
    %v449 = vpop.f32.mrb[0].mxu0
    %v450 = vadd.f32 0.0, %v449
    %v451 = vpop.f32.mrb[0].mxu0
    %452 = vmatprep.mubr.bf16.mxu0 0
    %453 = vmatmul.mubr.bf16.gmra.mrb[0].mxu0 %v212
    %v454 = vpop.f32.mrb[0].mxu0
    %v455 = vadd.f32 0.0, %v454
    %v456 = vpop.f32.mrb[0].mxu0
    %v457 = vpop.f32.mrb[0].mxu0
    %v458 = vadd.f32 0.0, %v457
    %v459 = vpop.f32.mrb[0].mxu0
    %460 = vmatprep.mubr.bf16.mxu0 0
    %461 = vmatmul.mubr.bf16.gmra.mrb[0].mxu0 %v213
    %v462 = vpop.f32.mrb[0].mxu0
    %v463 = vadd.f32 0.0, %v462
    %v464 = vpop.f32.mrb[0].mxu0
    %v465 = vpop.f32.mrb[0].mxu0
    %v466 = vadd.f32 0.0, %v465
    %v467 = vpop.f32.mrb[0].mxu0
    %468 = vmatprep.mubr.bf16.mxu0 0
    %469 = vmatmul.mubr.bf16.gmra.mrb[0].mxu0 %v214
    %v470 = vpop.f32.mrb[0].mxu0
    %v471 = vadd.f32 0.0, %v470
    %v472 = vpop.f32.mrb[0].mxu0
    %v473 = vpop.f32.mrb[0].mxu0
    %v474 = vadd.f32 0.0, %v473
    %v475 = vpop.f32.mrb[0].mxu0
    %476 = vmatprep.mubr.bf16.mxu0 0
    %477 = vmatmul.mubr.bf16.gmra.mrb[0].mxu0 %v215
    %v478 = vpop.f32.mrb[0].mxu0
    %v479 = vadd.f32 0.0, %v478
    %v480 = vpop.f32.mrb[0].mxu0
    %v481 = vpop.f32.mrb[0].mxu0
    %v482 = vadd.f32 0.0, %v481
    %v483 = vpop.f32.mrb[0].mxu0
    %484 = vmatprep.mubr.bf16.mxu0 0
    %485 = vmatmul.mubr.bf16.gmra.mrb[0].mxu0 %v216
    %v486 = vpop.f32.mrb[0].mxu0
    %v487 = vadd.f32 0.0, %v486
    %v488 = vpop.f32.mrb[0].mxu0
    %v489 = vpop.f32.mrb[0].mxu0
    %v490 = vadd.f32 0.0, %v489
    %v491 = vpop.f32.mrb[0].mxu0
    %492 = vmatprep.mubr.bf16.mxu0 0
    %493 = vmatmul.mubr.bf16.gmra.mrb[0].mxu0 %v217
    %v494 = vpop.f32.mrb[0].mxu0
    %v495 = vadd.f32 0.0, %v494
    %v496 = vpop.f32.mrb[0].mxu0
    %v497 = vpop.f32.mrb[0].mxu0
    %v498 = vadd.f32 0.0, %v497
    %v499 = vpop.f32.mrb[0].mxu0
    %500 = vmatprep.mubr.bf16.mxu0 0
    %501 = vmatmul.mubr.bf16.gmra.mrb[0].mxu0 %v218
    %v502 = vpop.f32.mrb[0].mxu0
    %v503 = vadd.f32 0.0, %v502
    %v504 = vpop.f32.mrb[0].mxu0
    %v505 = vpop.f32.mrb[0].mxu0
    %v506 = vadd.f32 0.0, %v505
    %v507 = vpop.f32.mrb[0].mxu0
    %508 = vdwg.mxu0
    %v525 = vunpack.c.l.b16 %v332
    %v526 = vunpack.c.l.b16 %v333
    %v527 = vunpack.c.l.b16 %v334
    %v528 = vunpack.c.l.b16 %v335
    %v529 = vunpack.c.l.b16 %v336
    %v530 = vunpack.c.l.b16 %v337
    %v531 = vunpack.c.l.b16 %v338
    %v532 = vunpack.c.l.b16 %v339
    %v533 = vunpack.c.l.b16 %v340
    %v534 = vunpack.c.l.b16 %v341
    %v535 = vunpack.c.l.b16 %v342
    %v536 = vunpack.c.l.b16 %v343
    %v537 = vunpack.c.l.b16 %v344
    %v538 = vunpack.c.l.b16 %v345
    %v539 = vunpack.c.l.b16 %v346
    %v540 = vunpack.c.l.b16 %v347
    %v541 = vpack.c.b16 %v526, %v525
    %v542 = vpack.c.b16 %v528, %v527
    %v543 = vpack.c.b16 %v530, %v529
    %v544 = vpack.c.b16 %v532, %v531
    %v545 = vpack.c.b16 %v534, %v533
    %v546 = vpack.c.b16 %v536, %v535
    %v547 = vpack.c.b16 %v538, %v537
    %v548 = vpack.c.b16 %v540, %v539
    %557 = vmatprep.subr.bf16.mxu0 0
    %558 = vmatpush1.bf16.msra.mxu0 %v541
    %559 = vmatprep.subr.bf16.mxu0 0
    %560 = vmatpush1.bf16.msra.mxu0 %v542
    %561 = vmatprep.subr.bf16.mxu0 0
    %562 = vmatpush1.bf16.msra.mxu0 %v543
    %563 = vmatprep.subr.bf16.mxu0 0
    %564 = vmatpush1.bf16.msra.mxu0 %v544
    %565 = vmatprep.subr.bf16.mxu0 0
    %566 = vmatpush1.bf16.msra.mxu0 %v545
    %567 = vmatprep.subr.bf16.mxu0 0
    %568 = vmatpush1.bf16.msra.mxu0 %v546
    %569 = vmatprep.subr.bf16.mxu0 0
    %570 = vmatpush1.bf16.msra.mxu0 %v547
    %571 = vmatprep.subr.bf16.mxu0 0
    %572 = vmatpush1.bf16.msra.mxu0 %v548
    %573 = vmatprep.subr.bf16.mxu0 0
    %574 = vmatpush1.bf16.msra.mxu0 0
    %575 = vmatprep.subr.bf16.mxu0 0
    %576 = vmatpush1.bf16.msra.mxu0 0
    %577 = vmatprep.subr.bf16.mxu0 0
    %578 = vmatpush1.bf16.msra.mxu0 0
    %579 = vmatprep.subr.bf16.mxu0 0
    %580 = vmatpush1.bf16.msra.mxu0 0
    %581 = vmatprep.subr.bf16.mxu0 0
    %582 = vmatpush1.bf16.msra.mxu0 0
    %583 = vmatprep.subr.bf16.mxu0 0
    %584 = vmatpush1.bf16.msra.mxu0 0
    %585 = vmatprep.subr.bf16.mxu0 0
    %586 = vmatpush1.bf16.msra.mxu0 0
    %587 = vmatprep.subr.bf16.mxu0 0
    %588 = vmatpush1.bf16.msra.mxu0 0
    %589 = vmatprep.mubr.bf16.mxu0 0
    %590 = vmatmul.mubr.bf16.gmra.mrb[0].mxu0 %v324
    %v591 = vpop.f32.mrb[0].mxu0
    %v592 = vadd.f32 %v447, %v591
    %v593 = vpop.f32.mrb[0].mxu0
    %v594 = vpop.f32.mrb[0].mxu0
    %v595 = vadd.f32 %v450, %v594
    %v596 = vpop.f32.mrb[0].mxu0
    %597 = vmatprep.mubr.bf16.mxu0 0
    %598 = vmatmul.mubr.bf16.gmra.mrb[0].mxu0 %v325
    %v599 = vpop.f32.mrb[0].mxu0
    %v600 = vadd.f32 %v455, %v599
    %v601 = vpop.f32.mrb[0].mxu0
    %v602 = vpop.f32.mrb[0].mxu0
    %v603 = vadd.f32 %v458, %v602
    %v604 = vpop.f32.mrb[0].mxu0
    %605 = vmatprep.mubr.bf16.mxu0 0
    %606 = vmatmul.mubr.bf16.gmra.mrb[0].mxu0 %v326
    %v607 = vpop.f32.mrb[0].mxu0
    %v608 = vadd.f32 %v463, %v607
    %v609 = vpop.f32.mrb[0].mxu0
    %v610 = vpop.f32.mrb[0].mxu0
    %v611 = vadd.f32 %v466, %v610
    %v612 = vpop.f32.mrb[0].mxu0
    %613 = vmatprep.mubr.bf16.mxu0 0
    %614 = vmatmul.mubr.bf16.gmra.mrb[0].mxu0 %v327
    %v615 = vpop.f32.mrb[0].mxu0
    %v616 = vadd.f32 %v471, %v615
    %v617 = vpop.f32.mrb[0].mxu0
    %v618 = vpop.f32.mrb[0].mxu0
    %v619 = vadd.f32 %v474, %v618
    %v620 = vpop.f32.mrb[0].mxu0
    %621 = vmatprep.mubr.bf16.mxu0 0
    %622 = vmatmul.mubr.bf16.gmra.mrb[0].mxu0 %v328
    %v623 = vpop.f32.mrb[0].mxu0
    %v624 = vadd.f32 %v479, %v623
    %v625 = vpop.f32.mrb[0].mxu0
    %v626 = vpop.f32.mrb[0].mxu0
    %v627 = vadd.f32 %v482, %v626
    %v628 = vpop.f32.mrb[0].mxu0
    %629 = vmatprep.mubr.bf16.mxu0 0
    %630 = vmatmul.mubr.bf16.gmra.mrb[0].mxu0 %v329
    %v631 = vpop.f32.mrb[0].mxu0
    %v632 = vadd.f32 %v487, %v631
    %v633 = vpop.f32.mrb[0].mxu0
    %v634 = vpop.f32.mrb[0].mxu0
    %v635 = vadd.f32 %v490, %v634
    %v636 = vpop.f32.mrb[0].mxu0
    %637 = vmatprep.mubr.bf16.mxu0 0
    %638 = vmatmul.mubr.bf16.gmra.mrb[0].mxu0 %v330
    %v639 = vpop.f32.mrb[0].mxu0
    %v640 = vadd.f32 %v495, %v639
    %v641 = vpop.f32.mrb[0].mxu0
    %v642 = vpop.f32.mrb[0].mxu0
    %v643 = vadd.f32 %v498, %v642
    %v644 = vpop.f32.mrb[0].mxu0
    %645 = vmatprep.mubr.bf16.mxu0 0
    %646 = vmatmul.mubr.bf16.gmra.mrb[0].mxu0 %v331
    %v647 = vpop.f32.mrb[0].mxu0
    %v648 = vadd.f32 %v503, %v647
    %v649 = vpop.f32.mrb[0].mxu0
    %v650 = vpop.f32.mrb[0].mxu0
    %v651 = vadd.f32 %v506, %v650
    %v652 = vpop.f32.mrb[0].mxu0
    %653 = vdwg.mxu0
    %v654 = vld [vmem:[%s3] sm:$0x1]
    %v656 = vlaneseq
    %v657 = vshrl.u32 %v656, 7
    %v658 = vsub.s32 0, %v657
    %v659 = vrot.slane %v654, %v658
    %v661 = vadd.f32 %v592, %v659
    %v662 = vadd.f32 %v595, %v659
    %v663 = vadd.f32 %v600, %v659
    %v664 = vadd.f32 %v603, %v659
    %v665 = vadd.f32 %v608, %v659
    %v666 = vadd.f32 %v611, %v659
    %v667 = vadd.f32 %v616, %v659
    %v668 = vadd.f32 %v619, %v659
    %v669 = vadd.f32 %v624, %v659
    %v670 = vadd.f32 %v627, %v659
    %v671 = vadd.f32 %v632, %v659
    %v672 = vadd.f32 %v635, %v659
    %v673 = vadd.f32 %v640, %v659
    %v674 = vadd.f32 %v643, %v659
    %v675 = vadd.f32 %v648, %v659
    %v676 = vadd.f32 %v651, %v659
    %v677 = vmax.f32 %v661, 0.0
    %v678 = vmax.f32 %v662, 0.0
    %v679 = vmax.f32 %v663, 0.0
    %v680 = vmax.f32 %v664, 0.0
    %v681 = vmax.f32 %v665, 0.0
    %v682 = vmax.f32 %v666, 0.0
    %v683 = vmax.f32 %v667, 0.0
    %v684 = vmax.f32 %v668, 0.0
    %v685 = vmax.f32 %v669, 0.0
    %v686 = vmax.f32 %v670, 0.0
    %v687 = vmax.f32 %v671, 0.0
    %v688 = vmax.f32 %v672, 0.0
    %v689 = vmax.f32 %v673, 0.0
    %v690 = vmax.f32 %v674, 0.0
    %v691 = vmax.f32 %v675, 0.0
    %v692 = vmax.f32 %v676, 0.0
    %v693 = vpack.c.bf16 %v678, %v677
    %v694 = vpack.c.bf16 %v680, %v679
    %v695 = vpack.c.bf16 %v682, %v681
    %v696 = vpack.c.bf16 %v684, %v683
    %v697 = vpack.c.bf16 %v686, %v685
    %v698 = vpack.c.bf16 %v688, %v687
    %v699 = vpack.c.bf16 %v690, %v689
    %v700 = vpack.c.bf16 %v692, %v691
    %701 = vst [vmem:[#allocation2] sm:$0xff] %v693
    %702 = vst [vmem:[#allocation2 + $0x8] sm:$0xff] %v694
    %703 = vst [vmem:[#allocation2 + $0x10] sm:$0xff] %v695
    %704 = vst [vmem:[#allocation2 + $0x18] sm:$0xff] %v696
    %705 = vst [vmem:[#allocation2 + $0x20] sm:$0xff] %v697
    %706 = vst [vmem:[#allocation2 + $0x28] sm:$0xff] %v698
    %707 = vst [vmem:[#allocation2 + $0x30] sm:$0xff] %v699
    %708 = vst [vmem:[#allocation2 + $0x38] sm:$0xff] %v700
    %v709 = vld [vmem:[#allocation2] sm:$0xff]
    %v710 = vld [vmem:[#allocation2 + $0x8] sm:$0xff]
    %v711 = vld [vmem:[#allocation2 + $0x10] sm:$0xff]
    %v712 = vld [vmem:[#allocation2 + $0x18] sm:$0xff]
    %v713 = vld [vmem:[#allocation2 + $0x20] sm:$0xff]
    %v714 = vld [vmem:[#allocation2 + $0x28] sm:$0xff]
    %v715 = vld [vmem:[#allocation2 + $0x30] sm:$0xff]
    %v716 = vld [vmem:[#allocation2 + $0x38] sm:$0xff]
    %717 = vmatprep.subr.bf16.mxu0 0
    %718 = vmatpush1.bf16.msra.mxu0 %v709
    %719 = vmatprep.subr.bf16.mxu0 0
    %720 = vmatpush1.bf16.msra.mxu0 %v710
    %721 = vmatprep.subr.bf16.mxu0 0
    %722 = vmatpush1.bf16.msra.mxu0 %v711
    %723 = vmatprep.subr.bf16.mxu0 0
    %724 = vmatpush1.bf16.msra.mxu0 %v712
    %725 = vmatprep.subr.bf16.mxu0 0
    %726 = vmatpush1.bf16.msra.mxu0 %v713
    %727 = vmatprep.subr.bf16.mxu0 0
    %728 = vmatpush1.bf16.msra.mxu0 %v714
    %729 = vmatprep.subr.bf16.mxu0 0
    %730 = vmatpush1.bf16.msra.mxu0 %v715
    %731 = vmatprep.subr.bf16.mxu0 0
    %732 = vmatpush1.bf16.msra.mxu0 %v716
    %733 = vmatprep.subr.bf16.mxu0 0
    %734 = vmatpush1.bf16.msra.mxu0 0
    %735 = vmatprep.subr.bf16.mxu0 0
    %736 = vmatpush1.bf16.msra.mxu0 0
    %737 = vmatprep.subr.bf16.mxu0 0
    %738 = vmatpush1.bf16.msra.mxu0 0
    %739 = vmatprep.subr.bf16.mxu0 0
    %740 = vmatpush1.bf16.msra.mxu0 0
    %741 = vmatprep.subr.bf16.mxu0 0
    %742 = vmatpush1.bf16.msra.mxu0 0
    %743 = vmatprep.subr.bf16.mxu0 0
    %744 = vmatpush1.bf16.msra.mxu0 0
    %745 = vmatprep.subr.bf16.mxu0 0
    %746 = vmatpush1.bf16.msra.mxu0 0
    %747 = vmatprep.subr.bf16.mxu0 0
    %748 = vmatpush1.bf16.msra.mxu0 0
    %749 = vmatprep.mubr.bf16.mxu0 0
    %750 = vmatmul.mubr.bf16.gmra.mrb[0].mxu0 %v163
    %v751 = vpop.f32.mrb[0].mxu0
    %v752 = vadd.f32 0.0, %v751
    %v753 = vpop.f32.mrb[0].mxu0
    %v754 = vpop.f32.mrb[0].mxu0
    %v755 = vadd.f32 0.0, %v754
    %v756 = vpop.f32.mrb[0].mxu0
    %757 = vmatprep.mubr.bf16.mxu0 0
    %758 = vmatmul.mubr.bf16.gmra.mrb[0].mxu0 %v164
    %v759 = vpop.f32.mrb[0].mxu0
    %v760 = vadd.f32 0.0, %v759
    %v761 = vpop.f32.mrb[0].mxu0
    %v762 = vpop.f32.mrb[0].mxu0
    %v763 = vadd.f32 0.0, %v762
    %v764 = vpop.f32.mrb[0].mxu0
    %765 = vmatprep.mubr.bf16.mxu0 0
    %766 = vmatmul.mubr.bf16.gmra.mrb[0].mxu0 %v165
    %v767 = vpop.f32.mrb[0].mxu0
    %v768 = vadd.f32 0.0, %v767
    %v769 = vpop.f32.mrb[0].mxu0
    %v770 = vpop.f32.mrb[0].mxu0
    %v771 = vadd.f32 0.0, %v770
    %v772 = vpop.f32.mrb[0].mxu0
    %773 = vmatprep.mubr.bf16.mxu0 0
    %774 = vmatmul.mubr.bf16.gmra.mrb[0].mxu0 %v166
    %v775 = vpop.f32.mrb[0].mxu0
    %v776 = vadd.f32 0.0, %v775
    %v777 = vpop.f32.mrb[0].mxu0
    %v778 = vpop.f32.mrb[0].mxu0
    %v779 = vadd.f32 0.0, %v778
    %v780 = vpop.f32.mrb[0].mxu0
    %781 = vmatprep.mubr.bf16.mxu0 0
    %782 = vmatmul.mubr.bf16.gmra.mrb[0].mxu0 %v167
    %v783 = vpop.f32.mrb[0].mxu0
    %v784 = vadd.f32 0.0, %v783
    %v785 = vpop.f32.mrb[0].mxu0
    %v786 = vpop.f32.mrb[0].mxu0
    %v787 = vadd.f32 0.0, %v786
    %v788 = vpop.f32.mrb[0].mxu0
    %789 = vmatprep.mubr.bf16.mxu0 0
    %790 = vmatmul.mubr.bf16.gmra.mrb[0].mxu0 %v168
    %v791 = vpop.f32.mrb[0].mxu0
    %v792 = vadd.f32 0.0, %v791
    %v793 = vpop.f32.mrb[0].mxu0
    %v794 = vpop.f32.mrb[0].mxu0
    %v795 = vadd.f32 0.0, %v794
    %v796 = vpop.f32.mrb[0].mxu0
    %797 = vmatprep.mubr.bf16.mxu0 0
    %798 = vmatmul.mubr.bf16.gmra.mrb[0].mxu0 %v169
    %v799 = vpop.f32.mrb[0].mxu0
    %v800 = vadd.f32 0.0, %v799
    %v801 = vpop.f32.mrb[0].mxu0
    %v802 = vpop.f32.mrb[0].mxu0
    %v803 = vadd.f32 0.0, %v802
    %v804 = vpop.f32.mrb[0].mxu0
    %805 = vmatprep.mubr.bf16.mxu0 0
    %806 = vmatmul.mubr.bf16.gmra.mrb[0].mxu0 %v170
    %v807 = vpop.f32.mrb[0].mxu0
    %v808 = vadd.f32 0.0, %v807
    %v809 = vpop.f32.mrb[0].mxu0
    %v810 = vpop.f32.mrb[0].mxu0
    %v811 = vadd.f32 0.0, %v810
    %v812 = vpop.f32.mrb[0].mxu0
    %813 = vdwg.mxu0
    %v814 = vpack.c.bf16 %v755, %v752
    %v815 = vpack.c.bf16 %v763, %v760
    %v816 = vpack.c.bf16 %v771, %v768
    %v817 = vpack.c.bf16 %v779, %v776
    %v818 = vpack.c.bf16 %v787, %v784
    %v819 = vpack.c.bf16 %v795, %v792
    %v820 = vpack.c.bf16 %v803, %v800
    %v821 = vpack.c.bf16 %v811, %v808
    %v822 = vld [vmem:[#allocation9] sm:$0xf]
    %v823 = vld [vmem:[#allocation9 + $0x4] sm:$0xf]
    %v824 = vld [vmem:[#allocation9 + $0x8] sm:$0xf]
    %v825 = vld [vmem:[#allocation9 + $0xc] sm:$0xf]
    %v826 = vld [vmem:[#allocation9 + $0x10] sm:$0xf]
    %v827 = vld [vmem:[#allocation9 + $0x14] sm:$0xf]
    %v828 = vld [vmem:[#allocation9 + $0x18] sm:$0xf]
    %v829 = vld [vmem:[#allocation9 + $0x1c] sm:$0xf]
    %v830 = vld [vmem:[#allocation9 + $0x20] sm:$0xf]
    %v831 = vld [vmem:[#allocation9 + $0x24] sm:$0xf]
    %v832 = vld [vmem:[#allocation9 + $0x28] sm:$0xf]
    %v833 = vld [vmem:[#allocation9 + $0x2c] sm:$0xf]
    %v834 = vld [vmem:[#allocation9 + $0x30] sm:$0xf]
    %v835 = vld [vmem:[#allocation9 + $0x34] sm:$0xf]
    %v836 = vld [vmem:[#allocation9 + $0x38] sm:$0xf]
    %v837 = vld [vmem:[#allocation9 + $0x3c] sm:$0xf]
    %v838 = vld [vmem:[#allocation9 + $0x40] sm:$0xf]
    %v839 = vld [vmem:[#allocation9 + $0x44] sm:$0xf]
    %v840 = vld [vmem:[#allocation9 + $0x48] sm:$0xf]
    %v841 = vld [vmem:[#allocation9 + $0x4c] sm:$0xf]
    %v842 = vld [vmem:[#allocation9 + $0x50] sm:$0xf]
    %v843 = vld [vmem:[#allocation9 + $0x54] sm:$0xf]
    %v844 = vld [vmem:[#allocation9 + $0x58] sm:$0xf]
    %v845 = vld [vmem:[#allocation9 + $0x5c] sm:$0xf]
    %v846 = vld [vmem:[#allocation9 + $0x60] sm:$0xf]
    %v847 = vld [vmem:[#allocation9 + $0x64] sm:$0xf]
    %v848 = vld [vmem:[#allocation9 + $0x68] sm:$0xf]
    %v849 = vld [vmem:[#allocation9 + $0x6c] sm:$0xf]
    %v850 = vld [vmem:[#allocation9 + $0x70] sm:$0xf]
    %v851 = vld [vmem:[#allocation9 + $0x74] sm:$0xf]
    %v852 = vld [vmem:[#allocation9 + $0x78] sm:$0xf]
    %v853 = vld [vmem:[#allocation9 + $0x7c] sm:$0xf]
    %v870 = vunpack.c.l.b16 %v838
    %v871 = vunpack.c.l.b16 %v839
    %v872 = vunpack.c.l.b16 %v840
    %v873 = vunpack.c.l.b16 %v841
    %v874 = vunpack.c.l.b16 %v842
    %v875 = vunpack.c.l.b16 %v843
    %v876 = vunpack.c.l.b16 %v844
    %v877 = vunpack.c.l.b16 %v845
    %v878 = vunpack.c.l.b16 %v846
    %v879 = vunpack.c.l.b16 %v847
    %v880 = vunpack.c.l.b16 %v848
    %v881 = vunpack.c.l.b16 %v849
    %v882 = vunpack.c.l.b16 %v850
    %v883 = vunpack.c.l.b16 %v851
    %v884 = vunpack.c.l.b16 %v852
    %v885 = vunpack.c.l.b16 %v853
    %v886 = vpack.c.b16 %v871, %v870
    %v887 = vpack.c.b16 %v873, %v872
    %v888 = vpack.c.b16 %v875, %v874
    %v889 = vpack.c.b16 %v877, %v876
    %v890 = vpack.c.b16 %v879, %v878
    %v891 = vpack.c.b16 %v881, %v880
    %v892 = vpack.c.b16 %v883, %v882
    %v893 = vpack.c.b16 %v885, %v884
    %902 = vmatprep.subr.bf16.mxu0 0
    %903 = vmatpush1.bf16.msra.mxu0 %v886
    %904 = vmatprep.subr.bf16.mxu0 0
    %905 = vmatpush1.bf16.msra.mxu0 %v887
    %906 = vmatprep.subr.bf16.mxu0 0
    %907 = vmatpush1.bf16.msra.mxu0 %v888
    %908 = vmatprep.subr.bf16.mxu0 0
    %909 = vmatpush1.bf16.msra.mxu0 %v889
    %910 = vmatprep.subr.bf16.mxu0 0
    %911 = vmatpush1.bf16.msra.mxu0 %v890
    %912 = vmatprep.subr.bf16.mxu0 0
    %913 = vmatpush1.bf16.msra.mxu0 %v891
    %914 = vmatprep.subr.bf16.mxu0 0
    %915 = vmatpush1.bf16.msra.mxu0 %v892
    %916 = vmatprep.subr.bf16.mxu0 0
    %917 = vmatpush1.bf16.msra.mxu0 %v893
    %918 = vmatprep.subr.bf16.mxu0 0
    %919 = vmatpush1.bf16.msra.mxu0 0
    %920 = vmatprep.subr.bf16.mxu0 0
    %921 = vmatpush1.bf16.msra.mxu0 0
    %922 = vmatprep.subr.bf16.mxu0 0
    %923 = vmatpush1.bf16.msra.mxu0 0
    %924 = vmatprep.subr.bf16.mxu0 0
    %925 = vmatpush1.bf16.msra.mxu0 0
    %926 = vmatprep.subr.bf16.mxu0 0
    %927 = vmatpush1.bf16.msra.mxu0 0
    %928 = vmatprep.subr.bf16.mxu0 0
    %929 = vmatpush1.bf16.msra.mxu0 0
    %930 = vmatprep.subr.bf16.mxu0 0
    %931 = vmatpush1.bf16.msra.mxu0 0
    %932 = vmatprep.subr.bf16.mxu0 0
    %933 = vmatpush1.bf16.msra.mxu0 0
    %934 = vmatprep.mubr.bf16.mxu0 0
    %935 = vmatmul.mubr.bf16.gmra.mrb[0].mxu0 %v709
    %v936 = vpop.f32.mrb[0].mxu0
    %v937 = vadd.f32 0.0, %v936
    %v938 = vpop.f32.mrb[0].mxu0
    %v939 = vpop.f32.mrb[0].mxu0
    %v940 = vadd.f32 0.0, %v939
    %v941 = vpop.f32.mrb[0].mxu0
    %942 = vmatprep.mubr.bf16.mxu0 0
    %943 = vmatmul.mubr.bf16.gmra.mrb[0].mxu0 %v710
    %v944 = vpop.f32.mrb[0].mxu0
    %v945 = vadd.f32 0.0, %v944
    %v946 = vpop.f32.mrb[0].mxu0
    %v947 = vpop.f32.mrb[0].mxu0
    %v948 = vadd.f32 0.0, %v947
    %v949 = vpop.f32.mrb[0].mxu0
    %950 = vmatprep.mubr.bf16.mxu0 0
    %951 = vmatmul.mubr.bf16.gmra.mrb[0].mxu0 %v711
    %v952 = vpop.f32.mrb[0].mxu0
    %v953 = vadd.f32 0.0, %v952
    %v954 = vpop.f32.mrb[0].mxu0
    %v955 = vpop.f32.mrb[0].mxu0
    %v956 = vadd.f32 0.0, %v955
    %v957 = vpop.f32.mrb[0].mxu0
    %958 = vmatprep.mubr.bf16.mxu0 0
    %959 = vmatmul.mubr.bf16.gmra.mrb[0].mxu0 %v712
    %v960 = vpop.f32.mrb[0].mxu0
    %v961 = vadd.f32 0.0, %v960
    %v962 = vpop.f32.mrb[0].mxu0
    %v963 = vpop.f32.mrb[0].mxu0
    %v964 = vadd.f32 0.0, %v963
    %v965 = vpop.f32.mrb[0].mxu0
    %966 = vmatprep.mubr.bf16.mxu0 0
    %967 = vmatmul.mubr.bf16.gmra.mrb[0].mxu0 %v713
    %v968 = vpop.f32.mrb[0].mxu0
    %v969 = vadd.f32 0.0, %v968
    %v970 = vpop.f32.mrb[0].mxu0
    %v971 = vpop.f32.mrb[0].mxu0
    %v972 = vadd.f32 0.0, %v971
    %v973 = vpop.f32.mrb[0].mxu0
    %974 = vmatprep.mubr.bf16.mxu0 0
    %975 = vmatmul.mubr.bf16.gmra.mrb[0].mxu0 %v714
    %v976 = vpop.f32.mrb[0].mxu0
    %v977 = vadd.f32 0.0, %v976
    %v978 = vpop.f32.mrb[0].mxu0
    %v979 = vpop.f32.mrb[0].mxu0
    %v980 = vadd.f32 0.0, %v979
    %v981 = vpop.f32.mrb[0].mxu0
    %982 = vmatprep.mubr.bf16.mxu0 0
    %983 = vmatmul.mubr.bf16.gmra.mrb[0].mxu0 %v715
    %v984 = vpop.f32.mrb[0].mxu0
    %v985 = vadd.f32 0.0, %v984
    %v986 = vpop.f32.mrb[0].mxu0
    %v987 = vpop.f32.mrb[0].mxu0
    %v988 = vadd.f32 0.0, %v987
    %v989 = vpop.f32.mrb[0].mxu0
    %990 = vmatprep.mubr.bf16.mxu0 0
    %991 = vmatmul.mubr.bf16.gmra.mrb[0].mxu0 %v716
    %v992 = vpop.f32.mrb[0].mxu0
    %v993 = vadd.f32 0.0, %v992
    %v994 = vpop.f32.mrb[0].mxu0
    %v995 = vpop.f32.mrb[0].mxu0
    %v996 = vadd.f32 0.0, %v995
    %v997 = vpop.f32.mrb[0].mxu0
    %998 = vdwg.mxu0
    %v1015 = vunpack.c.l.b16 %v822
    %v1016 = vunpack.c.l.b16 %v823
    %v1017 = vunpack.c.l.b16 %v824
    %v1018 = vunpack.c.l.b16 %v825
    %v1019 = vunpack.c.l.b16 %v826
    %v1020 = vunpack.c.l.b16 %v827
    %v1021 = vunpack.c.l.b16 %v828
    %v1022 = vunpack.c.l.b16 %v829
    %v1023 = vunpack.c.l.b16 %v830
    %v1024 = vunpack.c.l.b16 %v831
    %v1025 = vunpack.c.l.b16 %v832
    %v1026 = vunpack.c.l.b16 %v833
    %v1027 = vunpack.c.l.b16 %v834
    %v1028 = vunpack.c.l.b16 %v835
    %v1029 = vunpack.c.l.b16 %v836
    %v1030 = vunpack.c.l.b16 %v837
    %v1031 = vpack.c.b16 %v1016, %v1015
    %v1032 = vpack.c.b16 %v1018, %v1017
    %v1033 = vpack.c.b16 %v1020, %v1019
    %v1034 = vpack.c.b16 %v1022, %v1021
    %v1035 = vpack.c.b16 %v1024, %v1023
    %v1036 = vpack.c.b16 %v1026, %v1025
    %v1037 = vpack.c.b16 %v1028, %v1027
    %v1038 = vpack.c.b16 %v1030, %v1029
    %1047 = vmatprep.subr.bf16.mxu0 0
    %1048 = vmatpush1.bf16.msra.mxu0 %v1031
    %1049 = vmatprep.subr.bf16.mxu0 0
    %1050 = vmatpush1.bf16.msra.mxu0 %v1032
    %1051 = vmatprep.subr.bf16.mxu0 0
    %1052 = vmatpush1.bf16.msra.mxu0 %v1033
    %1053 = vmatprep.subr.bf16.mxu0 0
    %1054 = vmatpush1.bf16.msra.mxu0 %v1034
    %1055 = vmatprep.subr.bf16.mxu0 0
    %1056 = vmatpush1.bf16.msra.mxu0 %v1035
    %1057 = vmatprep.subr.bf16.mxu0 0
    %1058 = vmatpush1.bf16.msra.mxu0 %v1036
    %1059 = vmatprep.subr.bf16.mxu0 0
    %1060 = vmatpush1.bf16.msra.mxu0 %v1037
    %1061 = vmatprep.subr.bf16.mxu0 0
    %1062 = vmatpush1.bf16.msra.mxu0 %v1038
    %1063 = vmatprep.subr.bf16.mxu0 0
    %1064 = vmatpush1.bf16.msra.mxu0 0
    %1065 = vmatprep.subr.bf16.mxu0 0
    %1066 = vmatpush1.bf16.msra.mxu0 0
    %1067 = vmatprep.subr.bf16.mxu0 0
    %1068 = vmatpush1.bf16.msra.mxu0 0
    %1069 = vmatprep.subr.bf16.mxu0 0
    %1070 = vmatpush1.bf16.msra.mxu0 0
    %1071 = vmatprep.subr.bf16.mxu0 0
    %1072 = vmatpush1.bf16.msra.mxu0 0
    %1073 = vmatprep.subr.bf16.mxu0 0
    %1074 = vmatpush1.bf16.msra.mxu0 0
    %1075 = vmatprep.subr.bf16.mxu0 0
    %1076 = vmatpush1.bf16.msra.mxu0 0
    %1077 = vmatprep.subr.bf16.mxu0 0
    %1078 = vmatpush1.bf16.msra.mxu0 0
    %1079 = vmatprep.mubr.bf16.mxu0 0
    %1080 = vmatmul.mubr.bf16.gmra.mrb[0].mxu0 %v814
    %v1081 = vpop.f32.mrb[0].mxu0
    %v1082 = vadd.f32 %v937, %v1081
    %v1083 = vpop.f32.mrb[0].mxu0
    %v1084 = vpop.f32.mrb[0].mxu0
    %v1085 = vadd.f32 %v940, %v1084
    %v1086 = vpop.f32.mrb[0].mxu0
    %1087 = vmatprep.mubr.bf16.mxu0 0
    %1088 = vmatmul.mubr.bf16.gmra.mrb[0].mxu0 %v815
    %v1089 = vpop.f32.mrb[0].mxu0
    %v1090 = vadd.f32 %v945, %v1089
    %v1091 = vpop.f32.mrb[0].mxu0
    %v1092 = vpop.f32.mrb[0].mxu0
    %v1093 = vadd.f32 %v948, %v1092
    %v1094 = vpop.f32.mrb[0].mxu0
    %1095 = vmatprep.mubr.bf16.mxu0 0
    %1096 = vmatmul.mubr.bf16.gmra.mrb[0].mxu0 %v816
    %v1097 = vpop.f32.mrb[0].mxu0
    %v1098 = vadd.f32 %v953, %v1097
    %v1099 = vpop.f32.mrb[0].mxu0
    %v1100 = vpop.f32.mrb[0].mxu0
    %v1101 = vadd.f32 %v956, %v1100
    %v1102 = vpop.f32.mrb[0].mxu0
    %1103 = vmatprep.mubr.bf16.mxu0 0
    %1104 = vmatmul.mubr.bf16.gmra.mrb[0].mxu0 %v817
    %v1105 = vpop.f32.mrb[0].mxu0
    %v1106 = vadd.f32 %v961, %v1105
    %v1107 = vpop.f32.mrb[0].mxu0
    %v1108 = vpop.f32.mrb[0].mxu0
    %v1109 = vadd.f32 %v964, %v1108
    %v1110 = vpop.f32.mrb[0].mxu0
    %1111 = vmatprep.mubr.bf16.mxu0 0
    %1112 = vmatmul.mubr.bf16.gmra.mrb[0].mxu0 %v818
    %v1113 = vpop.f32.mrb[0].mxu0
    %v1114 = vadd.f32 %v969, %v1113
    %v1115 = vpop.f32.mrb[0].mxu0
    %v1116 = vpop.f32.mrb[0].mxu0
    %v1117 = vadd.f32 %v972, %v1116
    %v1118 = vpop.f32.mrb[0].mxu0
    %1119 = vmatprep.mubr.bf16.mxu0 0
    %1120 = vmatmul.mubr.bf16.gmra.mrb[0].mxu0 %v819
    %v1121 = vpop.f32.mrb[0].mxu0
    %v1122 = vadd.f32 %v977, %v1121
    %v1123 = vpop.f32.mrb[0].mxu0
    %v1124 = vpop.f32.mrb[0].mxu0
    %v1125 = vadd.f32 %v980, %v1124
    %v1126 = vpop.f32.mrb[0].mxu0
    %1127 = vmatprep.mubr.bf16.mxu0 0
    %1128 = vmatmul.mubr.bf16.gmra.mrb[0].mxu0 %v820
    %v1129 = vpop.f32.mrb[0].mxu0
    %v1130 = vadd.f32 %v985, %v1129
    %v1131 = vpop.f32.mrb[0].mxu0
    %v1132 = vpop.f32.mrb[0].mxu0
    %v1133 = vadd.f32 %v988, %v1132
    %v1134 = vpop.f32.mrb[0].mxu0
    %1135 = vmatprep.mubr.bf16.mxu0 0
    %1136 = vmatmul.mubr.bf16.gmra.mrb[0].mxu0 %v821
    %v1137 = vpop.f32.mrb[0].mxu0
    %v1138 = vadd.f32 %v993, %v1137
    %v1139 = vpop.f32.mrb[0].mxu0
    %v1140 = vpop.f32.mrb[0].mxu0
    %v1141 = vadd.f32 %v996, %v1140
    %v1142 = vpop.f32.mrb[0].mxu0
    %1143 = vdwg.mxu0
    %v1144 = vld [vmem:[%s5] sm:$0x1]
    %v1146 = vlaneseq
    %v1147 = vshrl.u32 %v1146, 7
    %v1148 = vsub.s32 0, %v1147
    %v1149 = vrot.slane %v1144, %v1148
    %v1151 = vadd.f32 %v1082, %v1149
    %v1152 = vadd.f32 %v1085, %v1149
    %v1153 = vadd.f32 %v1090, %v1149
    %v1154 = vadd.f32 %v1093, %v1149
    %v1155 = vadd.f32 %v1098, %v1149
    %v1156 = vadd.f32 %v1101, %v1149
    %v1157 = vadd.f32 %v1106, %v1149
    %v1158 = vadd.f32 %v1109, %v1149
    %v1159 = vadd.f32 %v1114, %v1149
    %v1160 = vadd.f32 %v1117, %v1149
    %v1161 = vadd.f32 %v1122, %v1149
    %v1162 = vadd.f32 %v1125, %v1149
    %v1163 = vadd.f32 %v1130, %v1149
    %v1164 = vadd.f32 %v1133, %v1149
    %v1165 = vadd.f32 %v1138, %v1149
    %v1166 = vadd.f32 %v1141, %v1149
    %v1167 = vmax.f32 %v1151, 0.0
    %v1168 = vmax.f32 %v1152, 0.0
    %v1169 = vmax.f32 %v1153, 0.0
    %v1170 = vmax.f32 %v1154, 0.0
    %v1171 = vmax.f32 %v1155, 0.0
    %v1172 = vmax.f32 %v1156, 0.0
    %v1173 = vmax.f32 %v1157, 0.0
    %v1174 = vmax.f32 %v1158, 0.0
    %v1175 = vmax.f32 %v1159, 0.0
    %v1176 = vmax.f32 %v1160, 0.0
    %v1177 = vmax.f32 %v1161, 0.0
    %v1178 = vmax.f32 %v1162, 0.0
    %v1179 = vmax.f32 %v1163, 0.0
    %v1180 = vmax.f32 %v1164, 0.0
    %v1181 = vmax.f32 %v1165, 0.0
    %v1182 = vmax.f32 %v1166, 0.0
    %v1183 = vpack.c.bf16 %v1168, %v1167
    %v1184 = vpack.c.bf16 %v1170, %v1169
    %v1185 = vpack.c.bf16 %v1172, %v1171
    %v1186 = vpack.c.bf16 %v1174, %v1173
    %v1187 = vpack.c.bf16 %v1176, %v1175
    %v1188 = vpack.c.bf16 %v1178, %v1177
    %v1189 = vpack.c.bf16 %v1180, %v1179
    %v1190 = vpack.c.bf16 %v1182, %v1181
    %1191 = vst [vmem:[#allocation2] sm:$0xff] %v1183
    %1192 = vst [vmem:[#allocation2 + $0x8] sm:$0xff] %v1184
    %1193 = vst [vmem:[#allocation2 + $0x10] sm:$0xff] %v1185
    %1194 = vst [vmem:[#allocation2 + $0x18] sm:$0xff] %v1186
    %1195 = vst [vmem:[#allocation2 + $0x20] sm:$0xff] %v1187
    %1196 = vst [vmem:[#allocation2 + $0x28] sm:$0xff] %v1188
    %1197 = vst [vmem:[#allocation2 + $0x30] sm:$0xff] %v1189
    %1198 = vst [vmem:[#allocation2 + $0x38] sm:$0xff] %v1190
    %v1199 = vld [vmem:[#allocation2] sm:$0xff]
    %v1200 = vld [vmem:[#allocation2 + $0x8] sm:$0xff]
    %v1201 = vld [vmem:[#allocation2 + $0x10] sm:$0xff]
    %v1202 = vld [vmem:[#allocation2 + $0x18] sm:$0xff]
    %v1203 = vld [vmem:[#allocation2 + $0x20] sm:$0xff]
    %v1204 = vld [vmem:[#allocation2 + $0x28] sm:$0xff]
    %v1205 = vld [vmem:[#allocation2 + $0x30] sm:$0xff]
    %v1206 = vld [vmem:[#allocation2 + $0x38] sm:$0xff]
    %1207 = vmatprep.subr.bf16.mxu0 0
    %1208 = vmatpush1.bf16.msra.mxu0 %v1199
    %1209 = vmatprep.subr.bf16.mxu0 0
    %1210 = vmatpush1.bf16.msra.mxu0 %v1200
    %1211 = vmatprep.subr.bf16.mxu0 0
    %1212 = vmatpush1.bf16.msra.mxu0 %v1201
    %1213 = vmatprep.subr.bf16.mxu0 0
    %1214 = vmatpush1.bf16.msra.mxu0 %v1202
    %1215 = vmatprep.subr.bf16.mxu0 0
    %1216 = vmatpush1.bf16.msra.mxu0 %v1203
    %1217 = vmatprep.subr.bf16.mxu0 0
    %1218 = vmatpush1.bf16.msra.mxu0 %v1204
    %1219 = vmatprep.subr.bf16.mxu0 0
    %1220 = vmatpush1.bf16.msra.mxu0 %v1205
    %1221 = vmatprep.subr.bf16.mxu0 0
    %1222 = vmatpush1.bf16.msra.mxu0 %v1206
    %1223 = vmatprep.subr.bf16.mxu0 0
    %1224 = vmatpush1.bf16.msra.mxu0 0
    %1225 = vmatprep.subr.bf16.mxu0 0
    %1226 = vmatpush1.bf16.msra.mxu0 0
    %1227 = vmatprep.subr.bf16.mxu0 0
    %1228 = vmatpush1.bf16.msra.mxu0 0
    %1229 = vmatprep.subr.bf16.mxu0 0
    %1230 = vmatpush1.bf16.msra.mxu0 0
    %1231 = vmatprep.subr.bf16.mxu0 0
    %1232 = vmatpush1.bf16.msra.mxu0 0
    %1233 = vmatprep.subr.bf16.mxu0 0
    %1234 = vmatpush1.bf16.msra.mxu0 0
    %1235 = vmatprep.subr.bf16.mxu0 0
    %1236 = vmatpush1.bf16.msra.mxu0 0
    %1237 = vmatprep.subr.bf16.mxu0 0
    %1238 = vmatpush1.bf16.msra.mxu0 0
    %1239 = vmatprep.mubr.bf16.mxu0 0
    %1240 = vmatmul.mubr.bf16.gmra.mrb[0].mxu0 %v163
    %v1241 = vpop.f32.mrb[0].mxu0
    %v1242 = vadd.f32 0.0, %v1241
    %v1243 = vpop.f32.mrb[0].mxu0
    %v1244 = vpop.f32.mrb[0].mxu0
    %v1245 = vadd.f32 0.0, %v1244
    %v1246 = vpop.f32.mrb[0].mxu0
    %1247 = vmatprep.mubr.bf16.mxu0 0
    %1248 = vmatmul.mubr.bf16.gmra.mrb[0].mxu0 %v164
    %v1249 = vpop.f32.mrb[0].mxu0
    %v1250 = vadd.f32 0.0, %v1249
    %v1251 = vpop.f32.mrb[0].mxu0
    %v1252 = vpop.f32.mrb[0].mxu0
    %v1253 = vadd.f32 0.0, %v1252
    %v1254 = vpop.f32.mrb[0].mxu0
    %1255 = vmatprep.mubr.bf16.mxu0 0
    %1256 = vmatmul.mubr.bf16.gmra.mrb[0].mxu0 %v165
    %v1257 = vpop.f32.mrb[0].mxu0
    %v1258 = vadd.f32 0.0, %v1257
    %v1259 = vpop.f32.mrb[0].mxu0
    %v1260 = vpop.f32.mrb[0].mxu0
    %v1261 = vadd.f32 0.0, %v1260
    %v1262 = vpop.f32.mrb[0].mxu0
    %1263 = vmatprep.mubr.bf16.mxu0 0
    %1264 = vmatmul.mubr.bf16.gmra.mrb[0].mxu0 %v166
    %v1265 = vpop.f32.mrb[0].mxu0
    %v1266 = vadd.f32 0.0, %v1265
    %v1267 = vpop.f32.mrb[0].mxu0
    %v1268 = vpop.f32.mrb[0].mxu0
    %v1269 = vadd.f32 0.0, %v1268
    %v1270 = vpop.f32.mrb[0].mxu0
    %1271 = vmatprep.mubr.bf16.mxu0 0
    %1272 = vmatmul.mubr.bf16.gmra.mrb[0].mxu0 %v167
    %v1273 = vpop.f32.mrb[0].mxu0
    %v1274 = vadd.f32 0.0, %v1273
    %v1275 = vpop.f32.mrb[0].mxu0
    %v1276 = vpop.f32.mrb[0].mxu0
    %v1277 = vadd.f32 0.0, %v1276
    %v1278 = vpop.f32.mrb[0].mxu0
    %1279 = vmatprep.mubr.bf16.mxu0 0
    %1280 = vmatmul.mubr.bf16.gmra.mrb[0].mxu0 %v168
    %v1281 = vpop.f32.mrb[0].mxu0
    %v1282 = vadd.f32 0.0, %v1281
    %v1283 = vpop.f32.mrb[0].mxu0
    %v1284 = vpop.f32.mrb[0].mxu0
    %v1285 = vadd.f32 0.0, %v1284
    %v1286 = vpop.f32.mrb[0].mxu0
    %1287 = vmatprep.mubr.bf16.mxu0 0
    %1288 = vmatmul.mubr.bf16.gmra.mrb[0].mxu0 %v169
    %v1289 = vpop.f32.mrb[0].mxu0
    %v1290 = vadd.f32 0.0, %v1289
    %v1291 = vpop.f32.mrb[0].mxu0
    %v1292 = vpop.f32.mrb[0].mxu0
    %v1293 = vadd.f32 0.0, %v1292
    %v1294 = vpop.f32.mrb[0].mxu0
    %1295 = vmatprep.mubr.bf16.mxu0 0
    %1296 = vmatmul.mubr.bf16.gmra.mrb[0].mxu0 %v170
    %v1297 = vpop.f32.mrb[0].mxu0
    %v1298 = vadd.f32 0.0, %v1297
    %v1299 = vpop.f32.mrb[0].mxu0
    %v1300 = vpop.f32.mrb[0].mxu0
    %v1301 = vadd.f32 0.0, %v1300
    %v1302 = vpop.f32.mrb[0].mxu0
    %1303 = vdwg.mxu0
    %v1304 = vpack.c.bf16 %v1245, %v1242
    %v1305 = vpack.c.bf16 %v1253, %v1250
    %v1306 = vpack.c.bf16 %v1261, %v1258
    %v1307 = vpack.c.bf16 %v1269, %v1266
    %v1308 = vpack.c.bf16 %v1277, %v1274
    %v1309 = vpack.c.bf16 %v1285, %v1282
    %v1310 = vpack.c.bf16 %v1293, %v1290
    %v1311 = vpack.c.bf16 %v1301, %v1298
    %v1312 = vld [vmem:[#allocation11] sm:$0xf]
    %v1313 = vld [vmem:[#allocation11 + $0x4] sm:$0xf]
    %v1314 = vld [vmem:[#allocation11 + $0x8] sm:$0xf]
    %v1315 = vld [vmem:[#allocation11 + $0xc] sm:$0xf]
    %v1316 = vld [vmem:[#allocation11 + $0x10] sm:$0xf]
    %v1317 = vld [vmem:[#allocation11 + $0x14] sm:$0xf]
    %v1318 = vld [vmem:[#allocation11 + $0x18] sm:$0xf]
    %v1319 = vld [vmem:[#allocation11 + $0x1c] sm:$0xf]
    %v1320 = vld [vmem:[#allocation11 + $0x20] sm:$0xf]
    %v1321 = vld [vmem:[#allocation11 + $0x24] sm:$0xf]
    %v1322 = vld [vmem:[#allocation11 + $0x28] sm:$0xf]
    %v1323 = vld [vmem:[#allocation11 + $0x2c] sm:$0xf]
    %v1324 = vld [vmem:[#allocation11 + $0x30] sm:$0xf]
    %v1325 = vld [vmem:[#allocation11 + $0x34] sm:$0xf]
    %v1326 = vld [vmem:[#allocation11 + $0x38] sm:$0xf]
    %v1327 = vld [vmem:[#allocation11 + $0x3c] sm:$0xf]
    %v1328 = vld [vmem:[#allocation11 + $0x40] sm:$0xf]
    %v1329 = vld [vmem:[#allocation11 + $0x44] sm:$0xf]
    %v1330 = vld [vmem:[#allocation11 + $0x48] sm:$0xf]
    %v1331 = vld [vmem:[#allocation11 + $0x4c] sm:$0xf]
    %v1332 = vld [vmem:[#allocation11 + $0x50] sm:$0xf]
    %v1333 = vld [vmem:[#allocation11 + $0x54] sm:$0xf]
    %v1334 = vld [vmem:[#allocation11 + $0x58] sm:$0xf]
    %v1335 = vld [vmem:[#allocation11 + $0x5c] sm:$0xf]
    %v1336 = vld [vmem:[#allocation11 + $0x60] sm:$0xf]
    %v1337 = vld [vmem:[#allocation11 + $0x64] sm:$0xf]
    %v1338 = vld [vmem:[#allocation11 + $0x68] sm:$0xf]
    %v1339 = vld [vmem:[#allocation11 + $0x6c] sm:$0xf]
    %v1340 = vld [vmem:[#allocation11 + $0x70] sm:$0xf]
    %v1341 = vld [vmem:[#allocation11 + $0x74] sm:$0xf]
    %v1342 = vld [vmem:[#allocation11 + $0x78] sm:$0xf]
    %v1343 = vld [vmem:[#allocation11 + $0x7c] sm:$0xf]
    %v1360 = vunpack.c.l.b16 %v1328
    %v1361 = vunpack.c.l.b16 %v1329
    %v1362 = vunpack.c.l.b16 %v1330
    %v1363 = vunpack.c.l.b16 %v1331
    %v1364 = vunpack.c.l.b16 %v1332
    %v1365 = vunpack.c.l.b16 %v1333
    %v1366 = vunpack.c.l.b16 %v1334
    %v1367 = vunpack.c.l.b16 %v1335
    %v1368 = vunpack.c.l.b16 %v1336
    %v1369 = vunpack.c.l.b16 %v1337
    %v1370 = vunpack.c.l.b16 %v1338
    %v1371 = vunpack.c.l.b16 %v1339
    %v1372 = vunpack.c.l.b16 %v1340
    %v1373 = vunpack.c.l.b16 %v1341
    %v1374 = vunpack.c.l.b16 %v1342
    %v1375 = vunpack.c.l.b16 %v1343
    %v1376 = vpack.c.b16 %v1361, %v1360
    %v1377 = vpack.c.b16 %v1363, %v1362
    %v1378 = vpack.c.b16 %v1365, %v1364
    %v1379 = vpack.c.b16 %v1367, %v1366
    %v1380 = vpack.c.b16 %v1369, %v1368
    %v1381 = vpack.c.b16 %v1371, %v1370
    %v1382 = vpack.c.b16 %v1373, %v1372
    %v1383 = vpack.c.b16 %v1375, %v1374
    %1392 = vmatprep.subr.bf16.mxu0 0
    %1393 = vmatpush1.bf16.msra.mxu0 %v1376
    %1394 = vmatprep.subr.bf16.mxu0 0
    %1395 = vmatpush1.bf16.msra.mxu0 %v1377
    %1396 = vmatprep.subr.bf16.mxu0 0
    %1397 = vmatpush1.bf16.msra.mxu0 %v1378
    %1398 = vmatprep.subr.bf16.mxu0 0
    %1399 = vmatpush1.bf16.msra.mxu0 %v1379
    %1400 = vmatprep.subr.bf16.mxu0 0
    %1401 = vmatpush1.bf16.msra.mxu0 %v1380
    %1402 = vmatprep.subr.bf16.mxu0 0
    %1403 = vmatpush1.bf16.msra.mxu0 %v1381
    %1404 = vmatprep.subr.bf16.mxu0 0
    %1405 = vmatpush1.bf16.msra.mxu0 %v1382
    %1406 = vmatprep.subr.bf16.mxu0 0
    %1407 = vmatpush1.bf16.msra.mxu0 %v1383
    %1408 = vmatprep.subr.bf16.mxu0 0
    %1409 = vmatpush1.bf16.msra.mxu0 0
    %1410 = vmatprep.subr.bf16.mxu0 0
    %1411 = vmatpush1.bf16.msra.mxu0 0
    %1412 = vmatprep.subr.bf16.mxu0 0
    %1413 = vmatpush1.bf16.msra.mxu0 0
    %1414 = vmatprep.subr.bf16.mxu0 0
    %1415 = vmatpush1.bf16.msra.mxu0 0
    %1416 = vmatprep.subr.bf16.mxu0 0
    %1417 = vmatpush1.bf16.msra.mxu0 0
    %1418 = vmatprep.subr.bf16.mxu0 0
    %1419 = vmatpush1.bf16.msra.mxu0 0
    %1420 = vmatprep.subr.bf16.mxu0 0
    %1421 = vmatpush1.bf16.msra.mxu0 0
    %1422 = vmatprep.subr.bf16.mxu0 0
    %1423 = vmatpush1.bf16.msra.mxu0 0
    %1424 = vmatprep.mubr.bf16.mxu0 0
    %1425 = vmatmul.mubr.bf16.gmra.mrb[0].mxu0 %v1199
    %v1426 = vpop.f32.mrb[0].mxu0
    %v1427 = vadd.f32 0.0, %v1426
    %v1428 = vpop.f32.mrb[0].mxu0
    %v1429 = vpop.f32.mrb[0].mxu0
    %v1430 = vadd.f32 0.0, %v1429
    %v1431 = vpop.f32.mrb[0].mxu0
    %1432 = vmatprep.mubr.bf16.mxu0 0
    %1433 = vmatmul.mubr.bf16.gmra.mrb[0].mxu0 %v1200
    %v1434 = vpop.f32.mrb[0].mxu0
    %v1435 = vadd.f32 0.0, %v1434
    %v1436 = vpop.f32.mrb[0].mxu0
    %v1437 = vpop.f32.mrb[0].mxu0
    %v1438 = vadd.f32 0.0, %v1437
    %v1439 = vpop.f32.mrb[0].mxu0
    %1440 = vmatprep.mubr.bf16.mxu0 0
    %1441 = vmatmul.mubr.bf16.gmra.mrb[0].mxu0 %v1201
    %v1442 = vpop.f32.mrb[0].mxu0
    %v1443 = vadd.f32 0.0, %v1442
    %v1444 = vpop.f32.mrb[0].mxu0
    %v1445 = vpop.f32.mrb[0].mxu0
    %v1446 = vadd.f32 0.0, %v1445
    %v1447 = vpop.f32.mrb[0].mxu0
    %1448 = vmatprep.mubr.bf16.mxu0 0
    %1449 = vmatmul.mubr.bf16.gmra.mrb[0].mxu0 %v1202
    %v1450 = vpop.f32.mrb[0].mxu0
    %v1451 = vadd.f32 0.0, %v1450
    %v1452 = vpop.f32.mrb[0].mxu0
    %v1453 = vpop.f32.mrb[0].mxu0
    %v1454 = vadd.f32 0.0, %v1453
    %v1455 = vpop.f32.mrb[0].mxu0
    %1456 = vmatprep.mubr.bf16.mxu0 0
    %1457 = vmatmul.mubr.bf16.gmra.mrb[0].mxu0 %v1203
    %v1458 = vpop.f32.mrb[0].mxu0
    %v1459 = vadd.f32 0.0, %v1458
    %v1460 = vpop.f32.mrb[0].mxu0
    %v1461 = vpop.f32.mrb[0].mxu0
    %v1462 = vadd.f32 0.0, %v1461
    %v1463 = vpop.f32.mrb[0].mxu0
    %1464 = vmatprep.mubr.bf16.mxu0 0
    %1465 = vmatmul.mubr.bf16.gmra.mrb[0].mxu0 %v1204
    %v1466 = vpop.f32.mrb[0].mxu0
    %v1467 = vadd.f32 0.0, %v1466
    %v1468 = vpop.f32.mrb[0].mxu0
    %v1469 = vpop.f32.mrb[0].mxu0
    %v1470 = vadd.f32 0.0, %v1469
    %v1471 = vpop.f32.mrb[0].mxu0
    %1472 = vmatprep.mubr.bf16.mxu0 0
    %1473 = vmatmul.mubr.bf16.gmra.mrb[0].mxu0 %v1205
    %v1474 = vpop.f32.mrb[0].mxu0
    %v1475 = vadd.f32 0.0, %v1474
    %v1476 = vpop.f32.mrb[0].mxu0
    %v1477 = vpop.f32.mrb[0].mxu0
    %v1478 = vadd.f32 0.0, %v1477
    %v1479 = vpop.f32.mrb[0].mxu0
    %1480 = vmatprep.mubr.bf16.mxu0 0
    %1481 = vmatmul.mubr.bf16.gmra.mrb[0].mxu0 %v1206
    %v1482 = vpop.f32.mrb[0].mxu0
    %v1483 = vadd.f32 0.0, %v1482
    %v1484 = vpop.f32.mrb[0].mxu0
    %v1485 = vpop.f32.mrb[0].mxu0
    %v1486 = vadd.f32 0.0, %v1485
    %v1487 = vpop.f32.mrb[0].mxu0
    %1488 = vdwg.mxu0
    %v1505 = vunpack.c.l.b16 %v1312
    %v1506 = vunpack.c.l.b16 %v1313
    %v1507 = vunpack.c.l.b16 %v1314
    %v1508 = vunpack.c.l.b16 %v1315
    %v1509 = vunpack.c.l.b16 %v1316
    %v1510 = vunpack.c.l.b16 %v1317
    %v1511 = vunpack.c.l.b16 %v1318
    %v1512 = vunpack.c.l.b16 %v1319
    %v1513 = vunpack.c.l.b16 %v1320
    %v1514 = vunpack.c.l.b16 %v1321
    %v1515 = vunpack.c.l.b16 %v1322
    %v1516 = vunpack.c.l.b16 %v1323
    %v1517 = vunpack.c.l.b16 %v1324
    %v1518 = vunpack.c.l.b16 %v1325
    %v1519 = vunpack.c.l.b16 %v1326
    %v1520 = vunpack.c.l.b16 %v1327
    %v1521 = vpack.c.b16 %v1506, %v1505
    %v1522 = vpack.c.b16 %v1508, %v1507
    %v1523 = vpack.c.b16 %v1510, %v1509
    %v1524 = vpack.c.b16 %v1512, %v1511
    %v1525 = vpack.c.b16 %v1514, %v1513
    %v1526 = vpack.c.b16 %v1516, %v1515
    %v1527 = vpack.c.b16 %v1518, %v1517
    %v1528 = vpack.c.b16 %v1520, %v1519
    %1537 = vmatprep.subr.bf16.mxu0 0
    %1538 = vmatpush1.bf16.msra.mxu0 %v1521
    %1539 = vmatprep.subr.bf16.mxu0 0
    %1540 = vmatpush1.bf16.msra.mxu0 %v1522
    %1541 = vmatprep.subr.bf16.mxu0 0
    %1542 = vmatpush1.bf16.msra.mxu0 %v1523
    %1543 = vmatprep.subr.bf16.mxu0 0
    %1544 = vmatpush1.bf16.msra.mxu0 %v1524
    %1545 = vmatprep.subr.bf16.mxu0 0
    %1546 = vmatpush1.bf16.msra.mxu0 %v1525
    %1547 = vmatprep.subr.bf16.mxu0 0
    %1548 = vmatpush1.bf16.msra.mxu0 %v1526
    %1549 = vmatprep.subr.bf16.mxu0 0
    %1550 = vmatpush1.bf16.msra.mxu0 %v1527
    %1551 = vmatprep.subr.bf16.mxu0 0
    %1552 = vmatpush1.bf16.msra.mxu0 %v1528
    %1553 = vmatprep.subr.bf16.mxu0 0
    %1554 = vmatpush1.bf16.msra.mxu0 0
    %1555 = vmatprep.subr.bf16.mxu0 0
    %1556 = vmatpush1.bf16.msra.mxu0 0
    %1557 = vmatprep.subr.bf16.mxu0 0
    %1558 = vmatpush1.bf16.msra.mxu0 0
    %1559 = vmatprep.subr.bf16.mxu0 0
    %1560 = vmatpush1.bf16.msra.mxu0 0
    %1561 = vmatprep.subr.bf16.mxu0 0
    %1562 = vmatpush1.bf16.msra.mxu0 0
    %1563 = vmatprep.subr.bf16.mxu0 0
    %1564 = vmatpush1.bf16.msra.mxu0 0
    %1565 = vmatprep.subr.bf16.mxu0 0
    %1566 = vmatpush1.bf16.msra.mxu0 0
    %1567 = vmatprep.subr.bf16.mxu0 0
    %1568 = vmatpush1.bf16.msra.mxu0 0
    %1569 = vmatprep.mubr.bf16.mxu0 0
    %1570 = vmatmul.mubr.bf16.gmra.mrb[0].mxu0 %v1304
    %v1571 = vpop.f32.mrb[0].mxu0
    %v1572 = vadd.f32 %v1427, %v1571
    %v1573 = vpop.f32.mrb[0].mxu0
    %v1574 = vpop.f32.mrb[0].mxu0
    %v1575 = vadd.f32 %v1430, %v1574
    %v1576 = vpop.f32.mrb[0].mxu0
    %1577 = vmatprep.mubr.bf16.mxu0 0
    %1578 = vmatmul.mubr.bf16.gmra.mrb[0].mxu0 %v1305
    %v1579 = vpop.f32.mrb[0].mxu0
    %v1580 = vadd.f32 %v1435, %v1579
    %v1581 = vpop.f32.mrb[0].mxu0
    %v1582 = vpop.f32.mrb[0].mxu0
    %v1583 = vadd.f32 %v1438, %v1582
    %v1584 = vpop.f32.mrb[0].mxu0
    %1585 = vmatprep.mubr.bf16.mxu0 0
    %1586 = vmatmul.mubr.bf16.gmra.mrb[0].mxu0 %v1306
    %v1587 = vpop.f32.mrb[0].mxu0
    %v1588 = vadd.f32 %v1443, %v1587
    %v1589 = vpop.f32.mrb[0].mxu0
    %v1590 = vpop.f32.mrb[0].mxu0
    %v1591 = vadd.f32 %v1446, %v1590
    %v1592 = vpop.f32.mrb[0].mxu0
    %1593 = vmatprep.mubr.bf16.mxu0 0
    %1594 = vmatmul.mubr.bf16.gmra.mrb[0].mxu0 %v1307
    %v1595 = vpop.f32.mrb[0].mxu0
    %v1596 = vadd.f32 %v1451, %v1595
    %v1597 = vpop.f32.mrb[0].mxu0
    %v1598 = vpop.f32.mrb[0].mxu0
    %v1599 = vadd.f32 %v1454, %v1598
    %v1600 = vpop.f32.mrb[0].mxu0
    %1601 = vmatprep.mubr.bf16.mxu0 0
    %1602 = vmatmul.mubr.bf16.gmra.mrb[0].mxu0 %v1308
    %v1603 = vpop.f32.mrb[0].mxu0
    %v1604 = vadd.f32 %v1459, %v1603
    %v1605 = vpop.f32.mrb[0].mxu0
    %v1606 = vpop.f32.mrb[0].mxu0
    %v1607 = vadd.f32 %v1462, %v1606
    %v1608 = vpop.f32.mrb[0].mxu0
    %1609 = vmatprep.mubr.bf16.mxu0 0
    %1610 = vmatmul.mubr.bf16.gmra.mrb[0].mxu0 %v1309
    %v1611 = vpop.f32.mrb[0].mxu0
    %v1612 = vadd.f32 %v1467, %v1611
    %v1613 = vpop.f32.mrb[0].mxu0
    %v1614 = vpop.f32.mrb[0].mxu0
    %v1615 = vadd.f32 %v1470, %v1614
    %v1616 = vpop.f32.mrb[0].mxu0
    %1617 = vmatprep.mubr.bf16.mxu0 0
    %1618 = vmatmul.mubr.bf16.gmra.mrb[0].mxu0 %v1310
    %v1619 = vpop.f32.mrb[0].mxu0
    %v1620 = vadd.f32 %v1475, %v1619
    %v1621 = vpop.f32.mrb[0].mxu0
    %v1622 = vpop.f32.mrb[0].mxu0
    %v1623 = vadd.f32 %v1478, %v1622
    %v1624 = vpop.f32.mrb[0].mxu0
    %1625 = vmatprep.mubr.bf16.mxu0 0
    %1626 = vmatmul.mubr.bf16.gmra.mrb[0].mxu0 %v1311
    %v1627 = vpop.f32.mrb[0].mxu0
    %v1628 = vadd.f32 %v1483, %v1627
    %v1629 = vpop.f32.mrb[0].mxu0
    %v1630 = vpop.f32.mrb[0].mxu0
    %v1631 = vadd.f32 %v1486, %v1630
    %v1632 = vpop.f32.mrb[0].mxu0
    %1633 = vdwg.mxu0
    %v1634 = vld [vmem:[%s7] sm:$0x1]
    %v1636 = vlaneseq
    %v1637 = vshrl.u32 %v1636, 7
    %v1638 = vsub.s32 0, %v1637
    %v1639 = vrot.slane %v1634, %v1638
    %v1641 = vadd.f32 %v1572, %v1639
    %v1642 = vadd.f32 %v1575, %v1639
    %v1643 = vadd.f32 %v1580, %v1639
    %v1644 = vadd.f32 %v1583, %v1639
    %v1645 = vadd.f32 %v1588, %v1639
    %v1646 = vadd.f32 %v1591, %v1639
    %v1647 = vadd.f32 %v1596, %v1639
    %v1648 = vadd.f32 %v1599, %v1639
    %v1649 = vadd.f32 %v1604, %v1639
    %v1650 = vadd.f32 %v1607, %v1639
    %v1651 = vadd.f32 %v1612, %v1639
    %v1652 = vadd.f32 %v1615, %v1639
    %v1653 = vadd.f32 %v1620, %v1639
    %v1654 = vadd.f32 %v1623, %v1639
    %v1655 = vadd.f32 %v1628, %v1639
    %v1656 = vadd.f32 %v1631, %v1639
    %1657 = vst [vmem:[#allocation12] sm:$0xff] %v1641
    %1658 = vst [vmem:[#allocation12 + $0x8] sm:$0xff] %v1642
    %1659 = vst [vmem:[#allocation12 + $0x10] sm:$0xff] %v1643
    %1660 = vst [vmem:[#allocation12 + $0x18] sm:$0xff] %v1644
    %1661 = vst [vmem:[#allocation12 + $0x20] sm:$0xff] %v1645
    %1662 = vst [vmem:[#allocation12 + $0x28] sm:$0xff] %v1646
    %1663 = vst [vmem:[#allocation12 + $0x30] sm:$0xff] %v1647
    %1664 = vst [vmem:[#allocation12 + $0x38] sm:$0xff] %v1648
    %1665 = vst [vmem:[#allocation12 + $0x40] sm:$0xff] %v1649
    %1666 = vst [vmem:[#allocation12 + $0x48] sm:$0xff] %v1650
    %1667 = vst [vmem:[#allocation12 + $0x50] sm:$0xff] %v1651
    %1668 = vst [vmem:[#allocation12 + $0x58] sm:$0xff] %v1652
    %1669 = vst [vmem:[#allocation12 + $0x60] sm:$0xff] %v1653
    %1670 = vst [vmem:[#allocation12 + $0x68] sm:$0xff] %v1654
    %1671 = vst [vmem:[#allocation12 + $0x70] sm:$0xff] %v1655
    %1672 = vst [vmem:[#allocation12 + $0x78] sm:$0xff] %v1656
    // Predicated region
    $region54: #{tpu_custom_call.1} parent=1 // pred_check
      _
    $region55: #{tpu_custom_call.1} parent=1 // pred_check_branch
      %1674 = sbr.rel (0) target = $region57
    $region56: #{tpu_custom_call.1} parent=1 // pred_region
      %s1676 = ssub.s32 2048, 2048
      %1677 = vsyncadd [#allocation5], %s1676
      %s1678 = sshll.u32 [#allocation12], 4
      %s1679 = int_to_ptr.vmem [resolvable:$true] %s1678
      %1684 = dma.vmem_to_hbm [thread:$0]  %s1679, 2048, %s8, [#allocation5], 128, 128, 8
    $region57: #{tpu_custom_call.1} parent=1 // pred_fallthru
      _
    // Predicated region
    $region58: #{tpu_custom_call.1} parent=1 // pred_check
      _
    $region59: #{tpu_custom_call.1} parent=1 // pred_check_branch
      %1686 = sbr.rel (0) target = $region61
    $region60: #{tpu_custom_call.1} parent=1 // pred_region
      %1687 = dma.done [#allocation5], 2048
    $region61: #{tpu_custom_call.1} parent=1 // pred_fallthru
      _
    %1688 = vsyncpa [#allocation4], 1
    %1689 = vsyncpa [#allocation7], 1
    %1690 = vsyncpa [#allocation10], 1
    %1691 = vsyncpa [#allocation5], 1

</llo_original>
